<compile_context>
chip_gen: v7x
topology: tpu7x:2x2x1
jax: 0.10.0
libtpu: 0.0.40
codegen_flags: <defaults>
</compile_context>

<pallas_src>
import functools
import math

import jax
import jax.numpy as jnp
from jax.experimental import pallas as pl
from jax.experimental.pallas import tpu as pltpu

_INV_SQRT2 = 1.0 / math.sqrt(2.0)
_EPS = 1e-5


def _fused_layer_kernel(x_ref, vecs_ref, bb1_ref, wqkv_ref, wout_ref,
                        w1_ref, w2_ref, o_ref, *, num_heads):
    """One VisionTransformerBlock applied in-place to the resident activation.

    Grid = (batch, depth).  o_ref (same block across the depth axis) carries the
    activation through the whole block stack; x_ref is only consumed at depth 0.
    """
    d = pl.program_id(1)

    @pl.when(d == 0)
    def _():
        o_ref[...] = x_ref[...]          # load the layer input into the resident buffer

    x = o_ref[...].astype(jnp.float32)   # (L, C) activation for block `d`
    L, C = x.shape
    dh = C // num_heads

    # packed per-channel vectors: rows = [g1, b1, bout, g2, b2, bb2, 0, 0]
    g1 = vecs_ref[0:1, :]
    b1 = vecs_ref[1:2, :]
    bout = vecs_ref[2:3, :]
    g2 = vecs_ref[3:4, :]
    b2 = vecs_ref[4:5, :]
    bb2 = vecs_ref[5:6, :]
    bb1 = bb1_ref[...]                   # (1, hidden)

    # ---- norm1 (LayerNorm over channels, biased variance, eps=1e-5) ----
    mu = jnp.mean(x, axis=-1, keepdims=True)
    var = jnp.mean(jnp.square(x - mu), axis=-1, keepdims=True)
    xn = ((x - mu) * jax.lax.rsqrt(var + _EPS)) * g1 + b1

    # ---- attention: to_qkv (no bias); q columns pre-scaled by dh**-0.5 on host ----
    qkv = jnp.dot(xn.astype(jnp.bfloat16), wqkv_ref[...],
                  preferred_element_type=jnp.float32)          # (L, 3C) f32

    dn_qkT = (((1,), (1,)), ((), ()))    # contract dh of q with dh of k -> q @ k^T (no transpose op)
    head_outs = []
    for h in range(num_heads):           # static loop; MXU pushes stay tiny either way at dh=8
        qh = qkv[:, h * dh:(h + 1) * dh].astype(jnp.bfloat16)
        kh = qkv[:, C + h * dh:C + (h + 1) * dh].astype(jnp.bfloat16)
        vh = qkv[:, 2 * C + h * dh:2 * C + (h + 1) * dh].astype(jnp.bfloat16)
        dots = jax.lax.dot_general(qh, kh, dn_qkT,
                                   preferred_element_type=jnp.float32)   # (L, L)
        m = jnp.max(dots, axis=-1, keepdims=True)
        p = jnp.exp(dots - m)
        attn = p * pl.reciprocal(jnp.sum(p, axis=-1, keepdims=True), approx=True)
        head_outs.append(jnp.dot(attn.astype(jnp.bfloat16), vh,
                                 preferred_element_type=jnp.float32))    # (L, dh)
    attn_out = jnp.concatenate(head_outs, axis=-1)             # (L, C) == 'b h n d -> b n (h d)'

    # ---- to_out projection (Linear + Dropout(p=0)) ----
    proj = jnp.dot(attn_out.astype(jnp.bfloat16), wout_ref[...],
                   preferred_element_type=jnp.float32) + bout

    # ---- residual 1 ----
    x1 = x + proj

    # ---- norm2 ----
    mu2 = jnp.mean(x1, axis=-1, keepdims=True)
    var2 = jnp.mean(jnp.square(x1 - mu2), axis=-1, keepdims=True)
    xn2 = ((x1 - mu2) * jax.lax.rsqrt(var2 + _EPS)) * g2 + b2

    # ---- MLP: fc1 -> exact GELU (erf) -> fc2 ----
    h1 = jnp.dot(xn2.astype(jnp.bfloat16), w1_ref[...],
                 preferred_element_type=jnp.float32) + bb1
    h1 = 0.5 * h1 * (1.0 + jax.lax.erf(h1 * _INV_SQRT2))
    h2 = jnp.dot(h1.astype(jnp.bfloat16), w2_ref[...],
                 preferred_element_type=jnp.float32) + bb2

    # ---- residual 2: write back into the resident activation ----
    o_ref[...] = (x1 + h2).astype(o_ref.dtype)


def basic_layer(x, blocks_params, num_heads):
    """BasicLayer.forward (no downsample): `depth` blocks fused in one pallas_call."""
    if not blocks_params:
        return x
    B, L, C = x.shape
    assert C % num_heads == 0
    depth = len(blocks_params)
    hidden = blocks_params[0]["w1"].shape[1]
    dh = C // num_heads
    scale = dh ** (-0.5)

    # ---- stack per-block params along a leading depth axis ----
    wqkv = jnp.stack([p["wqkv"] for p in blocks_params])                 # (depth, C, 3C) f32
    wqkv = wqkv.at[:, :, :C].multiply(scale)                             # fold qk scale into q
    wqkv = wqkv.astype(jnp.bfloat16)
    wout = jnp.stack([p["wout"] for p in blocks_params]).astype(jnp.bfloat16)   # (depth, C, C)
    w1 = jnp.stack([p["w1"] for p in blocks_params]).astype(jnp.bfloat16)       # (depth, C, hidden)
    w2 = jnp.stack([p["w2"] for p in blocks_params]).astype(jnp.bfloat16)       # (depth, hidden, C)

    zeros = jnp.zeros((depth, 1, C), jnp.float32)
    vecs = jnp.concatenate([                                             # (depth, 8, C) f32
        jnp.stack([p["g1"] for p in blocks_params]),
        jnp.stack([p["b1"] for p in blocks_params]),
        jnp.stack([p["bout"] for p in blocks_params]),
        jnp.stack([p["g2"] for p in blocks_params]),
        jnp.stack([p["b2"] for p in blocks_params]),
        jnp.stack([p["bb2"] for p in blocks_params]),
        zeros, zeros,
    ], axis=1).astype(jnp.float32)
    bb1 = jnp.stack([p["bb1"] for p in blocks_params]).astype(jnp.float32)      # (depth, 1, hidden)

    kernel = functools.partial(_fused_layer_kernel, num_heads=num_heads)

    return pl.pallas_call(
        kernel,
        out_shape=jax.ShapeDtypeStruct((B, L, C), x.dtype),
        grid_spec=pltpu.PrefetchScalarGridSpec(
            num_scalar_prefetch=0,
            grid=(B, depth),                 # depth innermost -> activation stays resident
            in_specs=[
                pl.BlockSpec((None, L, C), lambda b, d: (b, 0, 0)),          # x (read at d==0)
                pl.BlockSpec((None, 8, C), lambda b, d: (d, 0, 0)),          # packed vectors
                pl.BlockSpec((None, 1, hidden), lambda b, d: (d, 0, 0)),     # bb1
                pl.BlockSpec((None, C, 3 * C), lambda b, d: (d, 0, 0)),      # wqkv (bf16)
                pl.BlockSpec((None, C, C), lambda b, d: (d, 0, 0)),          # wout (bf16)
                pl.BlockSpec((None, C, hidden), lambda b, d: (d, 0, 0)),     # w1   (bf16)
                pl.BlockSpec((None, hidden, C), lambda b, d: (d, 0, 0)),     # w2   (bf16)
            ],
            out_specs=pl.BlockSpec((None, L, C), lambda b, d: (b, 0, 0)),    # resident across d
        ),
        compiler_params=pltpu.CompilerParams(
            dimension_semantics=("parallel", "arbitrary")),
    )(x, vecs, bb1, wqkv, wout, w1, w2)
    # TODO(synk): channel dim C=32 is not lane-dense (128); padding C would corrupt the
    # LayerNorm statistics without extra masking and 4x the matmul work at this config,
    # so the (small) masked-store cost on the output is accepted here.


def init_block_params(key, dim, mlp_ratio=4.0):
    """Deterministic synthetic parameters for one block (shapes per __init__), f32."""
    hidden = int(dim * mlp_ratio)
    inner = dim  # dim_head * heads == dim
    ks = jax.random.split(key, 6)
    f32 = jnp.float32
    return {
        "g1": jnp.ones((1, dim), f32),
        "b1": jnp.zeros((1, dim), f32),
        "wqkv": 0.02 * jax.random.normal(ks[0], (dim, 3 * inner), f32),
        "wout": 0.02 * jax.random.normal(ks[1], (inner, dim), f32),
        "bout": 0.01 * jax.random.normal(ks[2], (1, dim), f32),
        "g2": jnp.ones((1, dim), f32),
        "b2": jnp.zeros((1, dim), f32),
        "w1": 0.02 * jax.random.normal(ks[3], (dim, hidden), f32),
        "bb1": 0.01 * jax.random.normal(ks[4], (1, hidden), f32),
        "w2": 0.02 * jax.random.normal(ks[5], (hidden, dim), f32),
        "bb2": jnp.zeros((1, dim), f32),
    }


def _reference_layer(x, blocks_params, num_heads):
    """Pure-JAX f32 reference mirroring the PyTorch BasicLayer forward."""
    B, L, C = x.shape
    dh = C // num_heads
    scale = dh ** (-0.5)
    for p in blocks_params:
        mu = jnp.mean(x, -1, keepdims=True)
        var = jnp.mean(jnp.square(x - mu), -1, keepdims=True)
        xn = (x - mu) / jnp.sqrt(var + _EPS) * p["g1"] + p["b1"]
        qkv = xn @ p["wqkv"]
        q, k, v = jnp.split(qkv, 3, axis=-1)
        q = q.reshape(B, L, num_heads, dh).transpose(0, 2, 1, 3)
        k = k.reshape(B, L, num_heads, dh).transpose(0, 2, 1, 3)
        v = v.reshape(B, L, num_heads, dh).transpose(0, 2, 1, 3)
        dots = jnp.einsum('bhid,bhjd->bhij', q, k) * scale
        attn = jax.nn.softmax(dots, axis=-1)
        out = jnp.einsum('bhij,bhjd->bhid', attn, v)
        out = out.transpose(0, 2, 1, 3).reshape(B, L, C)
        x1 = x + (out @ p["wout"] + p["bout"])
        mu2 = jnp.mean(x1, -1, keepdims=True)
        var2 = jnp.mean(jnp.square(x1 - mu2), -1, keepdims=True)
        xn2 = (x1 - mu2) / jnp.sqrt(var2 + _EPS) * p["g2"] + p["b2"]
        h1 = xn2 @ p["w1"] + p["bb1"]
        h1 = 0.5 * h1 * (1.0 + jax.lax.erf(h1 * _INV_SQRT2))
        x = x1 + (h1 @ p["w2"] + p["bb2"])
    return x


if __name__ == "__main__":
    # Small config consistent with the module:
    # dim=32, input_resolution=(4, 4) -> L=16, depth=2, num_heads=4, mlp_ratio=4
    B, Hres, Wres, dim = 2, 4, 4, 32
    depth, num_heads = 2, 4
    L = Hres * Wres

    key = jax.random.PRNGKey(0)
    kx, kp = jax.random.split(key)
    x = jax.random.normal(kx, (B, L, dim), jnp.float32)

    blocks_params = [init_block_params(jax.random.fold_in(kp, i), dim)
                     for i in range(depth)]

    out = basic_layer(x, blocks_params, num_heads)
    out = jax.block_until_ready(out)
    assert out.shape == (B, L, dim)

    # correctness check vs. f32 reference (bf16 matmuls + approx reciprocal -> loose tol)
    ref = _reference_layer(x, blocks_params, num_heads)
    err = float(jnp.max(jnp.abs(out - ref)))
    assert err < 5e-2, f"max abs err too large: {err}"

    print("KERNEL_OK")
</pallas_src>

<mosaic_0001>
module attributes {stable_mosaic.version = 11 : i64} {
  func.func @_fused_layer_kernel(%arg0: i32, %arg1: i32, %arg2: memref<1x16x32xf32, #tpu.memory_space<vmem>>, %arg3: memref<1x8x32xf32, #tpu.memory_space<vmem>>, %arg4: memref<1x1x128xf32, #tpu.memory_space<vmem>>, %arg5: memref<1x32x96xbf16, #tpu.memory_space<vmem>>, %arg6: memref<1x32x32xbf16, #tpu.memory_space<vmem>>, %arg7: memref<1x32x128xbf16, #tpu.memory_space<vmem>>, %arg8: memref<1x128x32xbf16, #tpu.memory_space<vmem>>, %arg9: memref<1x16x32xf32, #tpu.memory_space<vmem>>) attributes {dimension_semantics = [#tpu.dimension_semantics<parallel>, #tpu.dimension_semantics<arbitrary>], iteration_bounds = array<i64: 2, 2>, scalar_prefetch = 0 : i64, scratch_operands = 0 : i64, tpu.core_type = #tpu.core_type<tc>, window_params = [{transform_indices = @transform_0, window_bounds = array<i64: 1, 16, 32>}, {transform_indices = @transform_1, window_bounds = array<i64: 1, 8, 32>}, {transform_indices = @transform_2, window_bounds = array<i64: 1, 1, 128>}, {transform_indices = @transform_3, window_bounds = array<i64: 1, 32, 96>}, {transform_indices = @transform_4, window_bounds = array<i64: 1, 32, 32>}, {transform_indices = @transform_5, window_bounds = array<i64: 1, 32, 128>}, {transform_indices = @transform_6, window_bounds = array<i64: 1, 128, 32>}, {transform_indices = @transform_7, window_bounds = array<i64: 1, 16, 32>}]} {
    %c0_i32 = arith.constant 0 : i32
    %0 = arith.cmpi eq, %arg1, %c0_i32 : i32
    %1 = arith.extui %0 : i1 to i32
    %c0_i32_0 = arith.constant 0 : i32
    %2 = arith.cmpi ne, %1, %c0_i32_0 : i32
    scf.if %2 {
      %c0_66 = arith.constant 0 : index
      %c0_67 = arith.constant 0 : index
      %c0_68 = arith.constant 0 : index
      %175 = vector.load %arg2[%c0_66, %c0_67, %c0_68] : memref<1x16x32xf32, #tpu.memory_space<vmem>>, vector<1x16x32xf32>
      %176 = vector.shape_cast %175 : vector<1x16x32xf32> to vector<16x32xf32>
      %c0_69 = arith.constant 0 : index
      %c0_70 = arith.constant 0 : index
      %c0_71 = arith.constant 0 : index
      %177 = vector.load %arg9[%c0_69, %c0_70, %c0_71] : memref<1x16x32xf32, #tpu.memory_space<vmem>>, vector<1x16x32xf32>
      %178 = vector.shape_cast %177 : vector<1x16x32xf32> to vector<16x32xf32>
      %179 = vector.shape_cast %176 : vector<16x32xf32> to vector<1x16x32xf32>
      tpu.vector_store %arg9[%c0_69, %c0_70, %c0_71], %179 {strides = array<i32>} : memref<1x16x32xf32, #tpu.memory_space<vmem>>, vector<1x16x32xf32>,
    } else {
    }
    %c0 = arith.constant 0 : index
    %c0_1 = arith.constant 0 : index
    %c0_2 = arith.constant 0 : index
    %3 = vector.load %arg9[%c0, %c0_1, %c0_2] : memref<1x16x32xf32, #tpu.memory_space<vmem>>, vector<1x16x32xf32>
    %4 = vector.shape_cast %3 : vector<1x16x32xf32> to vector<16x32xf32>
    %c0_3 = arith.constant 0 : index
    %c0_4 = arith.constant 0 : index
    %c0_5 = arith.constant 0 : index
    %5 = vector.load %arg3[%c0_3, %c0_4, %c0_5] : memref<1x8x32xf32, #tpu.memory_space<vmem>>, vector<1x1x32xf32>
    %6 = vector.shape_cast %5 : vector<1x1x32xf32> to vector<1x32xf32>
    %c0_6 = arith.constant 0 : index
    %c1 = arith.constant 1 : index
    %c0_7 = arith.constant 0 : index
    %7 = vector.load %arg3[%c0_6, %c1, %c0_7] : memref<1x8x32xf32, #tpu.memory_space<vmem>>, vector<1x1x32xf32>
    %8 = vector.shape_cast %7 : vector<1x1x32xf32> to vector<1x32xf32>
    %c0_8 = arith.constant 0 : index
    %c2 = arith.constant 2 : index
    %c0_9 = arith.constant 0 : index
    %9 = vector.load %arg3[%c0_8, %c2, %c0_9] : memref<1x8x32xf32, #tpu.memory_space<vmem>>, vector<1x1x32xf32>
    %10 = vector.shape_cast %9 : vector<1x1x32xf32> to vector<1x32xf32>
    %c0_10 = arith.constant 0 : index
    %c3 = arith.constant 3 : index
    %c0_11 = arith.constant 0 : index
    %11 = vector.load %arg3[%c0_10, %c3, %c0_11] : memref<1x8x32xf32, #tpu.memory_space<vmem>>, vector<1x1x32xf32>
    %12 = vector.shape_cast %11 : vector<1x1x32xf32> to vector<1x32xf32>
    %c0_12 = arith.constant 0 : index
    %c4 = arith.constant 4 : index
    %c0_13 = arith.constant 0 : index
    %13 = vector.load %arg3[%c0_12, %c4, %c0_13] : memref<1x8x32xf32, #tpu.memory_space<vmem>>, vector<1x1x32xf32>
    %14 = vector.shape_cast %13 : vector<1x1x32xf32> to vector<1x32xf32>
    %c0_14 = arith.constant 0 : index
    %c5 = arith.constant 5 : index
    %c0_15 = arith.constant 0 : index
    %15 = vector.load %arg3[%c0_14, %c5, %c0_15] : memref<1x8x32xf32, #tpu.memory_space<vmem>>, vector<1x1x32xf32>
    %16 = vector.shape_cast %15 : vector<1x1x32xf32> to vector<1x32xf32>
    %c0_16 = arith.constant 0 : index
    %c0_17 = arith.constant 0 : index
    %c0_18 = arith.constant 0 : index
    %17 = vector.load %arg4[%c0_16, %c0_17, %c0_18] : memref<1x1x128xf32, #tpu.memory_space<vmem>>, vector<1x1x128xf32>
    %18 = vector.shape_cast %17 : vector<1x1x128xf32> to vector<1x128xf32>
    %cst = arith.constant dense<0.000000e+00> : vector<16xf32>
    %19 = vector.multi_reduction <add>, %4, %cst [1] : vector<16x32xf32> to vector<16xf32>
    %20 = vector.shape_cast %19 : vector<16xf32> to vector<16x1xf32>
    %cst_19 = arith.constant 3.200000e+01 : f32
    %21 = vector.broadcast %cst_19 : f32 to vector<16x1xf32>
    %22 = arith.divf %20, %21 : vector<16x1xf32>
    %23 = vector.broadcast %22 : vector<16x1xf32> to vector<16x32xf32>
    %24 = arith.subf %4, %23 : vector<16x32xf32>
    %25 = arith.mulf %24, %24 : vector<16x32xf32>
    %cst_20 = arith.constant dense<0.000000e+00> : vector<16xf32>
    %26 = vector.multi_reduction <add>, %25, %cst_20 [1] : vector<16x32xf32> to vector<16xf32>
    %27 = vector.shape_cast %26 : vector<16xf32> to vector<16x1xf32>
    %cst_21 = arith.constant 3.200000e+01 : f32
    %28 = vector.broadcast %cst_21 : f32 to vector<16x1xf32>
    %29 = arith.divf %27, %28 : vector<16x1xf32>
    %30 = vector.broadcast %22 : vector<16x1xf32> to vector<16x32xf32>
    %31 = arith.subf %4, %30 : vector<16x32xf32>
    %cst_22 = arith.constant 9.99999974E-6 : f32
    %32 = vector.broadcast %cst_22 : f32 to vector<16x1xf32>
    %33 = arith.addf %29, %32 : vector<16x1xf32>
    %34 = math.rsqrt %33 : vector<16x1xf32>
    %35 = vector.broadcast %34 : vector<16x1xf32> to vector<16x32xf32>
    %36 = arith.mulf %31, %35 : vector<16x32xf32>
    %37 = vector.broadcast %6 : vector<1x32xf32> to vector<16x32xf32>
    %38 = arith.mulf %36, %37 : vector<16x32xf32>
    %39 = vector.broadcast %8 : vector<1x32xf32> to vector<16x32xf32>
    %40 = arith.addf %38, %39 : vector<16x32xf32>
    %41 = arith.truncf %40 : vector<16x32xf32> to vector<16x32xbf16>
    %c0_23 = arith.constant 0 : index
    %c0_24 = arith.constant 0 : index
    %c0_25 = arith.constant 0 : index
    %42 = vector.load %arg5[%c0_23, %c0_24, %c0_25] : memref<1x32x96xbf16, #tpu.memory_space<vmem>>, vector<1x32x96xbf16>
    %43 = vector.shape_cast %42 : vector<1x32x96xbf16> to vector<32x96xbf16>
    %cst_26 = arith.constant dense<0.000000e+00> : vector<16x96xf32>
    %44 = tpu.matmul %41, %43, %cst_26 {dimension_numbers = #tpu.dot_dimension_numbers<[1], [0], [0], [1], [0, 0, 1, 1], [], []>} : vector<16x32xbf16>, vector<32x96xbf16>, vector<16x96xf32> -> vector<16x96xf32>
    %45 = vector.extract_strided_slice %44 {offsets = [0, 0], sizes = [16, 8], strides = [1, 1]} : vector<16x96xf32> to vector<16x8xf32>
    %46 = arith.truncf %45 : vector<16x8xf32> to vector<16x8xbf16>
    %47 = vector.extract_strided_slice %44 {offsets = [0, 32], sizes = [16, 8], strides = [1, 1]} : vector<16x96xf32> to vector<16x8xf32>
    %48 = arith.truncf %47 : vector<16x8xf32> to vector<16x8xbf16>
    %49 = vector.extract_strided_slice %44 {offsets = [0, 64], sizes = [16, 8], strides = [1, 1]} : vector<16x96xf32> to vector<16x8xf32>
    %50 = arith.truncf %49 : vector<16x8xf32> to vector<16x8xbf16>
    %cst_27 = arith.constant dense<0.000000e+00> : vector<16x16xf32>
    %51 = tpu.matmul %46, %48, %cst_27 {dimension_numbers = #tpu.dot_dimension_numbers<[1], [1], [0], [0], [0, 0, 1, 0], [], []>} : vector<16x8xbf16>, vector<16x8xbf16>, vector<16x16xf32> -> vector<16x16xf32>
    %cst_28 = arith.constant dense<0xFF800000> : vector<16xf32>
    %52 = vector.multi_reduction <maximumf>, %51, %cst_28 [1] : vector<16x16xf32> to vector<16xf32>
    %53 = vector.shape_cast %52 : vector<16xf32> to vector<16x1xf32>
    %54 = vector.broadcast %53 : vector<16x1xf32> to vector<16x16xf32>
    %55 = arith.subf %51, %54 : vector<16x16xf32>
    %56 = math.exp %55 : vector<16x16xf32>
    %cst_29 = arith.constant dense<0.000000e+00> : vector<16xf32>
    %57 = vector.multi_reduction <add>, %56, %cst_29 [1] : vector<16x16xf32> to vector<16xf32>
    %58 = vector.shape_cast %57 : vector<16xf32> to vector<16x1xf32>
    %59 = tpu.reciprocal %58 {approx = true} : vector<16x1xf32> -> vector<16x1xf32>
    %60 = vector.broadcast %59 : vector<16x1xf32> to vector<16x16xf32>
    %61 = arith.mulf %56, %60 : vector<16x16xf32>
    %62 = arith.truncf %61 : vector<16x16xf32> to vector<16x16xbf16>
    %cst_30 = arith.constant dense<0.000000e+00> : vector<16x8xf32>
    %63 = tpu.matmul %62, %50, %cst_30 {dimension_numbers = #tpu.dot_dimension_numbers<[1], [0], [0], [1], [0, 0, 1, 1], [], []>} : vector<16x16xbf16>, vector<16x8xbf16>, vector<16x8xf32> -> vector<16x8xf32>
    %64 = vector.extract_strided_slice %44 {offsets = [0, 8], sizes = [16, 8], strides = [1, 1]} : vector<16x96xf32> to vector<16x8xf32>
    %65 = arith.truncf %64 : vector<16x8xf32> to vector<16x8xbf16>
    %66 = vector.extract_strided_slice %44 {offsets = [0, 40], sizes = [16, 8], strides = [1, 1]} : vector<16x96xf32> to vector<16x8xf32>
    %67 = arith.truncf %66 : vector<16x8xf32> to vector<16x8xbf16>
    %68 = vector.extract_strided_slice %44 {offsets = [0, 72], sizes = [16, 8], strides = [1, 1]} : vector<16x96xf32> to vector<16x8xf32>
    %69 = arith.truncf %68 : vector<16x8xf32> to vector<16x8xbf16>
    %cst_31 = arith.constant dense<0.000000e+00> : vector<16x16xf32>
    %70 = tpu.matmul %65, %67, %cst_31 {dimension_numbers = #tpu.dot_dimension_numbers<[1], [1], [0], [0], [0, 0, 1, 0], [], []>} : vector<16x8xbf16>, vector<16x8xbf16>, vector<16x16xf32> -> vector<16x16xf32>
    %cst_32 = arith.constant dense<0xFF800000> : vector<16xf32>
    %71 = vector.multi_reduction <maximumf>, %70, %cst_32 [1] : vector<16x16xf32> to vector<16xf32>
    %72 = vector.shape_cast %71 : vector<16xf32> to vector<16x1xf32>
    %73 = vector.broadcast %72 : vector<16x1xf32> to vector<16x16xf32>
    %74 = arith.subf %70, %73 : vector<16x16xf32>
    %75 = math.exp %74 : vector<16x16xf32>
    %cst_33 = arith.constant dense<0.000000e+00> : vector<16xf32>
    %76 = vector.multi_reduction <add>, %75, %cst_33 [1] : vector<16x16xf32> to vector<16xf32>
    %77 = vector.shape_cast %76 : vector<16xf32> to vector<16x1xf32>
    %78 = tpu.reciprocal %77 {approx = true} : vector<16x1xf32> -> vector<16x1xf32>
    %79 = vector.broadcast %78 : vector<16x1xf32> to vector<16x16xf32>
    %80 = arith.mulf %75, %79 : vector<16x16xf32>
    %81 = arith.truncf %80 : vector<16x16xf32> to vector<16x16xbf16>
    %cst_34 = arith.constant dense<0.000000e+00> : vector<16x8xf32>
    %82 = tpu.matmul %81, %69, %cst_34 {dimension_numbers = #tpu.dot_dimension_numbers<[1], [0], [0], [1], [0, 0, 1, 1], [], []>} : vector<16x16xbf16>, vector<16x8xbf16>, vector<16x8xf32> -> vector<16x8xf32>
    %83 = vector.extract_strided_slice %44 {offsets = [0, 16], sizes = [16, 8], strides = [1, 1]} : vector<16x96xf32> to vector<16x8xf32>
    %84 = arith.truncf %83 : vector<16x8xf32> to vector<16x8xbf16>
    %85 = vector.extract_strided_slice %44 {offsets = [0, 48], sizes = [16, 8], strides = [1, 1]} : vector<16x96xf32> to vector<16x8xf32>
    %86 = arith.truncf %85 : vector<16x8xf32> to vector<16x8xbf16>
    %87 = vector.extract_strided_slice %44 {offsets = [0, 80], sizes = [16, 8], strides = [1, 1]} : vector<16x96xf32> to vector<16x8xf32>
    %88 = arith.truncf %87 : vector<16x8xf32> to vector<16x8xbf16>
    %cst_35 = arith.constant dense<0.000000e+00> : vector<16x16xf32>
    %89 = tpu.matmul %84, %86, %cst_35 {dimension_numbers = #tpu.dot_dimension_numbers<[1], [1], [0], [0], [0, 0, 1, 0], [], []>} : vector<16x8xbf16>, vector<16x8xbf16>, vector<16x16xf32> -> vector<16x16xf32>
    %cst_36 = arith.constant dense<0xFF800000> : vector<16xf32>
    %90 = vector.multi_reduction <maximumf>, %89, %cst_36 [1] : vector<16x16xf32> to vector<16xf32>
    %91 = vector.shape_cast %90 : vector<16xf32> to vector<16x1xf32>
    %92 = vector.broadcast %91 : vector<16x1xf32> to vector<16x16xf32>
    %93 = arith.subf %89, %92 : vector<16x16xf32>
    %94 = math.exp %93 : vector<16x16xf32>
    %cst_37 = arith.constant dense<0.000000e+00> : vector<16xf32>
    %95 = vector.multi_reduction <add>, %94, %cst_37 [1] : vector<16x16xf32> to vector<16xf32>
    %96 = vector.shape_cast %95 : vector<16xf32> to vector<16x1xf32>
    %97 = tpu.reciprocal %96 {approx = true} : vector<16x1xf32> -> vector<16x1xf32>
    %98 = vector.broadcast %97 : vector<16x1xf32> to vector<16x16xf32>
    %99 = arith.mulf %94, %98 : vector<16x16xf32>
    %100 = arith.truncf %99 : vector<16x16xf32> to vector<16x16xbf16>
    %cst_38 = arith.constant dense<0.000000e+00> : vector<16x8xf32>
    %101 = tpu.matmul %100, %88, %cst_38 {dimension_numbers = #tpu.dot_dimension_numbers<[1], [0], [0], [1], [0, 0, 1, 1], [], []>} : vector<16x16xbf16>, vector<16x8xbf16>, vector<16x8xf32> -> vector<16x8xf32>
    %102 = vector.extract_strided_slice %44 {offsets = [0, 24], sizes = [16, 8], strides = [1, 1]} : vector<16x96xf32> to vector<16x8xf32>
    %103 = arith.truncf %102 : vector<16x8xf32> to vector<16x8xbf16>
    %104 = vector.extract_strided_slice %44 {offsets = [0, 56], sizes = [16, 8], strides = [1, 1]} : vector<16x96xf32> to vector<16x8xf32>
    %105 = arith.truncf %104 : vector<16x8xf32> to vector<16x8xbf16>
    %106 = vector.extract_strided_slice %44 {offsets = [0, 88], sizes = [16, 8], strides = [1, 1]} : vector<16x96xf32> to vector<16x8xf32>
    %107 = arith.truncf %106 : vector<16x8xf32> to vector<16x8xbf16>
    %cst_39 = arith.constant dense<0.000000e+00> : vector<16x16xf32>
    %108 = tpu.matmul %103, %105, %cst_39 {dimension_numbers = #tpu.dot_dimension_numbers<[1], [1], [0], [0], [0, 0, 1, 0], [], []>} : vector<16x8xbf16>, vector<16x8xbf16>, vector<16x16xf32> -> vector<16x16xf32>
    %cst_40 = arith.constant dense<0xFF800000> : vector<16xf32>
    %109 = vector.multi_reduction <maximumf>, %108, %cst_40 [1] : vector<16x16xf32> to vector<16xf32>
    %110 = vector.shape_cast %109 : vector<16xf32> to vector<16x1xf32>
    %111 = vector.broadcast %110 : vector<16x1xf32> to vector<16x16xf32>
    %112 = arith.subf %108, %111 : vector<16x16xf32>
    %113 = math.exp %112 : vector<16x16xf32>
    %cst_41 = arith.constant dense<0.000000e+00> : vector<16xf32>
    %114 = vector.multi_reduction <add>, %113, %cst_41 [1] : vector<16x16xf32> to vector<16xf32>
    %115 = vector.shape_cast %114 : vector<16xf32> to vector<16x1xf32>
    %116 = tpu.reciprocal %115 {approx = true} : vector<16x1xf32> -> vector<16x1xf32>
    %117 = vector.broadcast %116 : vector<16x1xf32> to vector<16x16xf32>
    %118 = arith.mulf %113, %117 : vector<16x16xf32>
    %119 = arith.truncf %118 : vector<16x16xf32> to vector<16x16xbf16>
    %cst_42 = arith.constant dense<0.000000e+00> : vector<16x8xf32>
    %120 = tpu.matmul %119, %107, %cst_42 {dimension_numbers = #tpu.dot_dimension_numbers<[1], [0], [0], [1], [0, 0, 1, 1], [], []>} : vector<16x16xbf16>, vector<16x8xbf16>, vector<16x8xf32> -> vector<16x8xf32>
    %121 = tpu.concatenate %63, %82, %101, %120 in 1 : vector<16x8xf32>, vector<16x8xf32>, vector<16x8xf32>, vector<16x8xf32> -> vector<16x32xf32>
    %122 = arith.truncf %121 : vector<16x32xf32> to vector<16x32xbf16>
    %c0_43 = arith.constant 0 : index
    %c0_44 = arith.constant 0 : index
    %c0_45 = arith.constant 0 : index
    %123 = vector.load %arg6[%c0_43, %c0_44, %c0_45] : memref<1x32x32xbf16, #tpu.memory_space<vmem>>, vector<1x32x32xbf16>
    %124 = vector.shape_cast %123 : vector<1x32x32xbf16> to vector<32x32xbf16>
    %cst_46 = arith.constant dense<0.000000e+00> : vector<16x32xf32>
    %125 = tpu.matmul %122, %124, %cst_46 {dimension_numbers = #tpu.dot_dimension_numbers<[1], [0], [0], [1], [0, 0, 1, 1], [], []>} : vector<16x32xbf16>, vector<32x32xbf16>, vector<16x32xf32> -> vector<16x32xf32>
    %126 = vector.broadcast %10 : vector<1x32xf32> to vector<16x32xf32>
    %127 = arith.addf %125, %126 : vector<16x32xf32>
    %128 = arith.addf %4, %127 : vector<16x32xf32>
    %cst_47 = arith.constant dense<0.000000e+00> : vector<16xf32>
    %129 = vector.multi_reduction <add>, %128, %cst_47 [1] : vector<16x32xf32> to vector<16xf32>
    %130 = vector.shape_cast %129 : vector<16xf32> to vector<16x1xf32>
    %cst_48 = arith.constant 3.200000e+01 : f32
    %131 = vector.broadcast %cst_48 : f32 to vector<16x1xf32>
    %132 = arith.divf %130, %131 : vector<16x1xf32>
    %133 = vector.broadcast %132 : vector<16x1xf32> to vector<16x32xf32>
    %134 = arith.subf %128, %133 : vector<16x32xf32>
    %135 = arith.mulf %134, %134 : vector<16x32xf32>
    %cst_49 = arith.constant dense<0.000000e+00> : vector<16xf32>
    %136 = vector.multi_reduction <add>, %135, %cst_49 [1] : vector<16x32xf32> to vector<16xf32>
    %137 = vector.shape_cast %136 : vector<16xf32> to vector<16x1xf32>
    %cst_50 = arith.constant 3.200000e+01 : f32
    %138 = vector.broadcast %cst_50 : f32 to vector<16x1xf32>
    %139 = arith.divf %137, %138 : vector<16x1xf32>
    %140 = vector.broadcast %132 : vector<16x1xf32> to vector<16x32xf32>
    %141 = arith.subf %128, %140 : vector<16x32xf32>
    %cst_51 = arith.constant 9.99999974E-6 : f32
    %142 = vector.broadcast %cst_51 : f32 to vector<16x1xf32>
    %143 = arith.addf %139, %142 : vector<16x1xf32>
    %144 = math.rsqrt %143 : vector<16x1xf32>
    %145 = vector.broadcast %144 : vector<16x1xf32> to vector<16x32xf32>
    %146 = arith.mulf %141, %145 : vector<16x32xf32>
    %147 = vector.broadcast %12 : vector<1x32xf32> to vector<16x32xf32>
    %148 = arith.mulf %146, %147 : vector<16x32xf32>
    %149 = vector.broadcast %14 : vector<1x32xf32> to vector<16x32xf32>
    %150 = arith.addf %148, %149 : vector<16x32xf32>
    %151 = arith.truncf %150 : vector<16x32xf32> to vector<16x32xbf16>
    %c0_52 = arith.constant 0 : index
    %c0_53 = arith.constant 0 : index
    %c0_54 = arith.constant 0 : index
    %152 = vector.load %arg7[%c0_52, %c0_53, %c0_54] : memref<1x32x128xbf16, #tpu.memory_space<vmem>>, vector<1x32x128xbf16>
    %153 = vector.shape_cast %152 : vector<1x32x128xbf16> to vector<32x128xbf16>
    %cst_55 = arith.constant dense<0.000000e+00> : vector<16x128xf32>
    %154 = tpu.matmul %151, %153, %cst_55 {dimension_numbers = #tpu.dot_dimension_numbers<[1], [0], [0], [1], [0, 0, 1, 1], [], []>} : vector<16x32xbf16>, vector<32x128xbf16>, vector<16x128xf32> -> vector<16x128xf32>
    %155 = vector.broadcast %18 : vector<1x128xf32> to vector<16x128xf32>
    %156 = arith.addf %154, %155 : vector<16x128xf32>
    %cst_56 = arith.constant 5.000000e-01 : f32
    %157 = vector.broadcast %cst_56 : f32 to vector<16x128xf32>
    %158 = arith.mulf %157, %156 : vector<16x128xf32>
    %cst_57 = arith.constant 0.707106769 : f32
    %159 = vector.broadcast %cst_57 : f32 to vector<16x128xf32>
    %160 = arith.mulf %156, %159 : vector<16x128xf32>
    %161 = math.erf %160 : vector<16x128xf32>
    %cst_58 = arith.constant 1.000000e+00 : f32
    %162 = vector.broadcast %cst_58 : f32 to vector<16x128xf32>
    %163 = arith.addf %162, %161 : vector<16x128xf32>
    %164 = arith.mulf %158, %163 : vector<16x128xf32>
    %165 = arith.truncf %164 : vector<16x128xf32> to vector<16x128xbf16>
    %c0_59 = arith.constant 0 : index
    %c0_60 = arith.constant 0 : index
    %c0_61 = arith.constant 0 : index
    %166 = vector.load %arg8[%c0_59, %c0_60, %c0_61] : memref<1x128x32xbf16, #tpu.memory_space<vmem>>, vector<1x128x32xbf16>
    %167 = vector.shape_cast %166 : vector<1x128x32xbf16> to vector<128x32xbf16>
    %cst_62 = arith.constant dense<0.000000e+00> : vector<16x32xf32>
    %168 = tpu.matmul %165, %167, %cst_62 {dimension_numbers = #tpu.dot_dimension_numbers<[1], [0], [0], [1], [0, 0, 1, 1], [], []>} : vector<16x128xbf16>, vector<128x32xbf16>, vector<16x32xf32> -> vector<16x32xf32>
    %169 = vector.broadcast %16 : vector<1x32xf32> to vector<16x32xf32>
    %170 = arith.addf %168, %169 : vector<16x32xf32>
    %171 = arith.addf %128, %170 : vector<16x32xf32>
    %c0_63 = arith.constant 0 : index
    %c0_64 = arith.constant 0 : index
    %c0_65 = arith.constant 0 : index
    %172 = vector.load %arg9[%c0_63, %c0_64, %c0_65] : memref<1x16x32xf32, #tpu.memory_space<vmem>>, vector<1x16x32xf32>
    %173 = vector.shape_cast %172 : vector<1x16x32xf32> to vector<16x32xf32>
    %174 = vector.shape_cast %171 : vector<16x32xf32> to vector<1x16x32xf32>
    tpu.vector_store %arg9[%c0_63, %c0_64, %c0_65], %174 {strides = array<i32>} : memref<1x16x32xf32, #tpu.memory_space<vmem>>, vector<1x16x32xf32>,
    return
  }
  func.func @transform_0(%arg0: i32, %arg1: i32) -> (i32, i32, i32) {
    %c0_i32 = arith.constant 0 : i32
    %c0_i32_0 = arith.constant 0 : i32
    %c0_i32_1 = arith.constant 0 : i32
    return %arg0, %c0_i32, %c0_i32_0 : i32, i32, i32
  }
  func.func @transform_1(%arg0: i32, %arg1: i32) -> (i32, i32, i32) {
    %c0_i32 = arith.constant 0 : i32
    %c0_i32_0 = arith.constant 0 : i32
    %c0_i32_1 = arith.constant 0 : i32
    return %arg1, %c0_i32, %c0_i32_0 : i32, i32, i32
  }
  func.func @transform_2(%arg0: i32, %arg1: i32) -> (i32, i32, i32) {
    %c0_i32 = arith.constant 0 : i32
    %c0_i32_0 = arith.constant 0 : i32
    %c0_i32_1 = arith.constant 0 : i32
    return %arg1, %c0_i32, %c0_i32_0 : i32, i32, i32
  }
  func.func @transform_3(%arg0: i32, %arg1: i32) -> (i32, i32, i32) {
    %c0_i32 = arith.constant 0 : i32
    %c0_i32_0 = arith.constant 0 : i32
    %c0_i32_1 = arith.constant 0 : i32
    return %arg1, %c0_i32, %c0_i32_0 : i32, i32, i32
  }
  func.func @transform_4(%arg0: i32, %arg1: i32) -> (i32, i32, i32) {
    %c0_i32 = arith.constant 0 : i32
    %c0_i32_0 = arith.constant 0 : i32
    %c0_i32_1 = arith.constant 0 : i32
    return %arg1, %c0_i32, %c0_i32_0 : i32, i32, i32
  }
  func.func @transform_5(%arg0: i32, %arg1: i32) -> (i32, i32, i32) {
    %c0_i32 = arith.constant 0 : i32
    %c0_i32_0 = arith.constant 0 : i32
    %c0_i32_1 = arith.constant 0 : i32
    return %arg1, %c0_i32, %c0_i32_0 : i32, i32, i32
  }
  func.func @transform_6(%arg0: i32, %arg1: i32) -> (i32, i32, i32) {
    %c0_i32 = arith.constant 0 : i32
    %c0_i32_0 = arith.constant 0 : i32
    %c0_i32_1 = arith.constant 0 : i32
    return %arg1, %c0_i32, %c0_i32_0 : i32, i32, i32
  }
  func.func @transform_7(%arg0: i32, %arg1: i32) -> (i32, i32, i32) {
    %c0_i32 = arith.constant 0 : i32
    %c0_i32_0 = arith.constant 0 : i32
    %c0_i32_1 = arith.constant 0 : i32
    return %arg0, %c0_i32, %c0_i32_0 : i32, i32, i32
  }
}

</mosaic_0001>

<llo_original>
// kernel: tpu_custom_call.1
$region0: #{tpu_custom_call.1}
  #allocation0 [shape = 'u32[]', space=smem, size = 0x4, offset = 0x4, fixed_abs, tag = 'smem constant byte address 0x4 - core index']
  #allocation1 [shape = 'u32[144,128]{1,0:T(1,128)}', space=vmem, size = 0x12000, scoped, tag = 'internal scratch']
  %s0 = inlined_call_operand.vmem [shape: f32[2,16,32], index: 0, kind: input, shape index: {}]
  %s1 = inlined_call_operand.vmem [shape: f32[2,8,32], index: 1, kind: input, shape index: {}]
  %s2 = inlined_call_operand.vmem [shape: f32[2,1,128], index: 2, kind: input, shape index: {}]
  %s3 = inlined_call_operand.vmem [shape: bf16[2,32,96], index: 3, kind: input, shape index: {}]
  %s4 = inlined_call_operand.vmem [shape: bf16[2,32,32], index: 4, kind: input, shape index: {}]
  %s5 = inlined_call_operand.vmem [shape: bf16[2,32,128], index: 5, kind: input, shape index: {}]
  %s6 = inlined_call_operand.vmem [shape: bf16[2,128,32], index: 6, kind: input, shape index: {}]
  %s7 = inlined_call_operand.hbm [shape: f32[2,16,32], index: 7, kind: output, shape index: {}]
  %s8 = sld [smem:[#allocation0]]
  $region65: #{tpu_custom_call.1} parent=0
    _
  %s10 = ssub.s32 1, %s8
  %s11 = scalar_select 0, %s10, %s8
  $region1: #{tpu_custom_call.1} parent=0
    #allocation2 [shape = 'u8[16384]{0}', space=vmem, size = 0x4000, scoped, tag = 'output window, operand 0']
    #allocation3 [shape = 's32[2]{0}', space=sflag, size = 0x8, scoped, tag = 'scoped memory for tpu_custom_call.1']
    %12 = vsyncpa [#allocation3], 0
    %s13 = scalar_lea.sflag [#allocation3], 1
    %14 = vsyncpa %s13, 0
    loop: start=0, step=1, limit=6
    $region2: #{tpu_custom_call.1} parent=1 // loop_pre_header
      _
    $region3: #{tpu_custom_call.1} parent=1 // loop_header
      %s16 = sphi 0, %s20
      %p17 = scmp.ge.s32.totalorder %s16, 6
      %s23 = sphi 0, %s35
      %s24 = sphi 0, %s31
      %s25 = sphi 0, %s23
      %s26 = sphi 0, %s24
      %s27 = sphi 0, %s25
      %s28 = sphi 0, %s26
      %s38 = sphi 0, %s40
      %s41 = sphi 0, %s38
      %s42 = sphi 0, %s41
      %s58 = sphi 0, %s42
      %s64 = sphi 0, %s66
      %s67 = sphi 0, %s64
      %s68 = sphi 0, %s67
      %s84 = sphi 0, %s68
      %s90 = sphi 0, %s92
      %s93 = sphi 0, %s90
      %s94 = sphi 0, %s93
      %s110 = sphi 0, %s94
      %s116 = sphi 0, %s118
      %s119 = sphi 0, %s116
      %s120 = sphi 0, %s119
      %s136 = sphi 0, %s120
      %s142 = sphi 0, %s144
      %s145 = sphi 0, %s142
      %s146 = sphi 0, %s145
      %s162 = sphi 0, %s146
      %s168 = sphi 0, %s170
      %s171 = sphi 0, %s168
      %s172 = sphi 0, %s171
      %s188 = sphi 0, %s172
      %s194 = sphi 0, %s196
      %s197 = sphi 0, %s194
      %s198 = sphi 0, %s197
      %s214 = sphi 0, %s198
      %s220 = sphi 0, %s222
      %s223 = sphi 0, %s220
      %s224 = sphi 0, %s223
      %s240 = sphi 0, %s224
    $region4: #{tpu_custom_call.1} parent=1 // loop_header_branch
      %19 = sbr.rel (%p17) target = $region8
    $region5: #{tpu_custom_call.1} parent=1 // loop_body
      %s21 = ssub.s32 %s16, 1
      %s22 = ssub.s32 %s16, 2
      %s29 = sadd.s32 1, %s24
      %p30 = scmp.ge.s32.totalorder %s29, 2
      %s31 = scalar_select %p30, 0, %s29
      %s32 = sadd.s32 1, %s23
      %s33 = scalar_select %p30, %s32, %s23
      %p34 = scmp.ge.s32.totalorder %s33, 2
      %s35 = scalar_select %p34, 0, %s33
      %s36 = ssub.s32 %s23, %s35
      %p37 = scmp.eq.s32.totalorder %s36, 0
      %s39 = sadd.s32 %s38, 1
      %s40 = scalar_select %p37, %s38, %s39
      %p43 = pneg %p37
      %p44 = scmp.eq.s32.totalorder %s16, 3
      %p45 = por %p43, %p44
      %p46 = scmp.ne.s32.totalorder %s38, %s41
      %p47 = scmp.eq.s32.totalorder %s16, 0
      %p48 = por %p46, %p47
      %p49 = scmp.ne.s32.totalorder %s38, %s41
      %p50 = scmp.eq.s32.totalorder %s21, 3
      %p51 = por %p49, %p50
      %p52 = scmp.ne.s32.totalorder %s41, %s42
      %p53 = scmp.eq.s32.totalorder %s21, 0
      %p54 = por %p52, %p53
      %p55 = scmp.ne.s32.totalorder %s41, %s42
      %p56 = scmp.eq.s32.totalorder %s22, 3
      %p57 = por %p55, %p56
      %p59 = scmp.ne.s32.totalorder %s42, %s58
      %p60 = scmp.eq.s32.totalorder %s22, 0
      %p61 = por %p59, %p60
      %s62 = ssub.s32 %s24, %s31
      %p63 = scmp.eq.s32.totalorder %s62, 0
      %s65 = sadd.s32 %s64, 1
      %s66 = scalar_select %p63, %s64, %s65
      %p69 = pneg %p63
      %p70 = scmp.eq.s32.totalorder %s16, 3
      %p71 = por %p69, %p70
      %p72 = scmp.ne.s32.totalorder %s64, %s67
      %p73 = scmp.eq.s32.totalorder %s16, 0
      %p74 = por %p72, %p73
      %p75 = scmp.ne.s32.totalorder %s64, %s67
      %p76 = scmp.eq.s32.totalorder %s21, 3
      %p77 = por %p75, %p76
      %p78 = scmp.ne.s32.totalorder %s67, %s68
      %p79 = scmp.eq.s32.totalorder %s21, 0
      %p80 = por %p78, %p79
      %p81 = scmp.ne.s32.totalorder %s67, %s68
      %p82 = scmp.eq.s32.totalorder %s22, 3
      %p83 = por %p81, %p82
      %p85 = scmp.ne.s32.totalorder %s68, %s84
      %p86 = scmp.eq.s32.totalorder %s22, 0
      %p87 = por %p85, %p86
      %s88 = ssub.s32 %s24, %s31
      %p89 = scmp.eq.s32.totalorder %s88, 0
      %s91 = sadd.s32 %s90, 1
      %s92 = scalar_select %p89, %s90, %s91
      %p95 = pneg %p89
      %p96 = scmp.eq.s32.totalorder %s16, 3
      %p97 = por %p95, %p96
      %p98 = scmp.ne.s32.totalorder %s90, %s93
      %p99 = scmp.eq.s32.totalorder %s16, 0
      %p100 = por %p98, %p99
      %p101 = scmp.ne.s32.totalorder %s90, %s93
      %p102 = scmp.eq.s32.totalorder %s21, 3
      %p103 = por %p101, %p102
      %p104 = scmp.ne.s32.totalorder %s93, %s94
      %p105 = scmp.eq.s32.totalorder %s21, 0
      %p106 = por %p104, %p105
      %p107 = scmp.ne.s32.totalorder %s93, %s94
      %p108 = scmp.eq.s32.totalorder %s22, 3
      %p109 = por %p107, %p108
      %p111 = scmp.ne.s32.totalorder %s94, %s110
      %p112 = scmp.eq.s32.totalorder %s22, 0
      %p113 = por %p111, %p112
      %s114 = ssub.s32 %s24, %s31
      %p115 = scmp.eq.s32.totalorder %s114, 0
      %s117 = sadd.s32 %s116, 1
      %s118 = scalar_select %p115, %s116, %s117
      %p121 = pneg %p115
      %p122 = scmp.eq.s32.totalorder %s16, 3
      %p123 = por %p121, %p122
      %p124 = scmp.ne.s32.totalorder %s116, %s119
      %p125 = scmp.eq.s32.totalorder %s16, 0
      %p126 = por %p124, %p125
      %p127 = scmp.ne.s32.totalorder %s116, %s119
      %p128 = scmp.eq.s32.totalorder %s21, 3
      %p129 = por %p127, %p128
      %p130 = scmp.ne.s32.totalorder %s119, %s120
      %p131 = scmp.eq.s32.totalorder %s21, 0
      %p132 = por %p130, %p131
      %p133 = scmp.ne.s32.totalorder %s119, %s120
      %p134 = scmp.eq.s32.totalorder %s22, 3
      %p135 = por %p133, %p134
      %p137 = scmp.ne.s32.totalorder %s120, %s136
      %p138 = scmp.eq.s32.totalorder %s22, 0
      %p139 = por %p137, %p138
      %s140 = ssub.s32 %s24, %s31
      %p141 = scmp.eq.s32.totalorder %s140, 0
      %s143 = sadd.s32 %s142, 1
      %s144 = scalar_select %p141, %s142, %s143
      %p147 = pneg %p141
      %p148 = scmp.eq.s32.totalorder %s16, 3
      %p149 = por %p147, %p148
      %p150 = scmp.ne.s32.totalorder %s142, %s145
      %p151 = scmp.eq.s32.totalorder %s16, 0
      %p152 = por %p150, %p151
      %p153 = scmp.ne.s32.totalorder %s142, %s145
      %p154 = scmp.eq.s32.totalorder %s21, 3
      %p155 = por %p153, %p154
      %p156 = scmp.ne.s32.totalorder %s145, %s146
      %p157 = scmp.eq.s32.totalorder %s21, 0
      %p158 = por %p156, %p157
      %p159 = scmp.ne.s32.totalorder %s145, %s146
      %p160 = scmp.eq.s32.totalorder %s22, 3
      %p161 = por %p159, %p160
      %p163 = scmp.ne.s32.totalorder %s146, %s162
      %p164 = scmp.eq.s32.totalorder %s22, 0
      %p165 = por %p163, %p164
      %s166 = ssub.s32 %s24, %s31
      %p167 = scmp.eq.s32.totalorder %s166, 0
      %s169 = sadd.s32 %s168, 1
      %s170 = scalar_select %p167, %s168, %s169
      %p173 = pneg %p167
      %p174 = scmp.eq.s32.totalorder %s16, 3
      %p175 = por %p173, %p174
      %p176 = scmp.ne.s32.totalorder %s168, %s171
      %p177 = scmp.eq.s32.totalorder %s16, 0
      %p178 = por %p176, %p177
      %p179 = scmp.ne.s32.totalorder %s168, %s171
      %p180 = scmp.eq.s32.totalorder %s21, 3
      %p181 = por %p179, %p180
      %p182 = scmp.ne.s32.totalorder %s171, %s172
      %p183 = scmp.eq.s32.totalorder %s21, 0
      %p184 = por %p182, %p183
      %p185 = scmp.ne.s32.totalorder %s171, %s172
      %p186 = scmp.eq.s32.totalorder %s22, 3
      %p187 = por %p185, %p186
      %p189 = scmp.ne.s32.totalorder %s172, %s188
      %p190 = scmp.eq.s32.totalorder %s22, 0
      %p191 = por %p189, %p190
      %s192 = ssub.s32 %s24, %s31
      %p193 = scmp.eq.s32.totalorder %s192, 0
      %s195 = sadd.s32 %s194, 1
      %s196 = scalar_select %p193, %s194, %s195
      %p199 = pneg %p193
      %p200 = scmp.eq.s32.totalorder %s16, 3
      %p201 = por %p199, %p200
      %p202 = scmp.ne.s32.totalorder %s194, %s197
      %p203 = scmp.eq.s32.totalorder %s16, 0
      %p204 = por %p202, %p203
      %p205 = scmp.ne.s32.totalorder %s194, %s197
      %p206 = scmp.eq.s32.totalorder %s21, 3
      %p207 = por %p205, %p206
      %p208 = scmp.ne.s32.totalorder %s197, %s198
      %p209 = scmp.eq.s32.totalorder %s21, 0
      %p210 = por %p208, %p209
      %p211 = scmp.ne.s32.totalorder %s197, %s198
      %p212 = scmp.eq.s32.totalorder %s22, 3
      %p213 = por %p211, %p212
      %p215 = scmp.ne.s32.totalorder %s198, %s214
      %p216 = scmp.eq.s32.totalorder %s22, 0
      %p217 = por %p215, %p216
      %s218 = ssub.s32 %s23, %s35
      %p219 = scmp.eq.s32.totalorder %s218, 0
      %s221 = sadd.s32 %s220, 1
      %s222 = scalar_select %p219, %s220, %s221
      %p225 = pneg %p219
      %p226 = scmp.eq.s32.totalorder %s16, 3
      %p227 = por %p225, %p226
      %p228 = scmp.ne.s32.totalorder %s220, %s223
      %p229 = scmp.eq.s32.totalorder %s16, 0
      %p230 = por %p228, %p229
      %p231 = scmp.ne.s32.totalorder %s220, %s223
      %p232 = scmp.eq.s32.totalorder %s21, 3
      %p233 = por %p231, %p232
      %p234 = scmp.ne.s32.totalorder %s223, %s224
      %p235 = scmp.eq.s32.totalorder %s21, 0
      %p236 = por %p234, %p235
      %p237 = scmp.ne.s32.totalorder %s223, %s224
      %p238 = scmp.eq.s32.totalorder %s22, 3
      %p239 = por %p237, %p238
      %p241 = scmp.ne.s32.totalorder %s224, %s240
      %p242 = scmp.eq.s32.totalorder %s22, 0
      %p243 = por %p241, %p242
      %p244 = scmp.le.s32.totalorder 1, %s16
      %p245 = scmp.lt.s32.totalorder %s16, 5
      %p246 = pnand %p244, %p245
      %p247 = pneg %p246
      // Predicated region
      $region9: #{tpu_custom_call.1} parent=5 // pred_check
        _
      $region10: #{tpu_custom_call.1} parent=5 // pred_check_branch
        %249 = sbr.rel (%p246) target = $region12
      $region11: #{tpu_custom_call.1} parent=5 // pred_region
        %s250 = ssub.s32 %s16, 1
      $region12: #{tpu_custom_call.1} parent=5 // pred_fallthru
        _
      %p251 = scmp.lt.s32.totalorder %s16, 4
      // Predicated region
      $region13: #{tpu_custom_call.1} parent=5 // pred_check
        %p252 = pneg %p251
      $region14: #{tpu_custom_call.1} parent=5 // pred_check_branch
        %254 = sbr.rel (%p252) target = $region16
      $region15: #{tpu_custom_call.1} parent=5 // pred_region
        // Predicated region
        $region17: #{tpu_custom_call.1} parent=15 // pred_check
          %p255 = pneg %p48
        $region18: #{tpu_custom_call.1} parent=15 // pred_check_branch
          %257 = sbr.rel (%p255) target = $region20
        $region19: #{tpu_custom_call.1} parent=15 // pred_region
          %p258 = scmp.lt.s32.totalorder %s23, 1
          %s259 = scalar_select %p258, %s23, 1
          %s260 = smul.addr %s259, 2
          %s261 = smul.addr %s260, 8
          %s262 = scalar_lea.vmem %s0, %s261
        $region20: #{tpu_custom_call.1} parent=15 // pred_fallthru
          _
        // Predicated region
        $region21: #{tpu_custom_call.1} parent=15 // pred_check
          %p263 = pneg %p74
        $region22: #{tpu_custom_call.1} parent=15 // pred_check_branch
          %265 = sbr.rel (%p263) target = $region24
        $region23: #{tpu_custom_call.1} parent=15 // pred_region
          %p266 = scmp.lt.s32.totalorder %s24, 1
          %s267 = scalar_select %p266, %s24, 1
          %s268 = smul.addr %s267, 8
          %s269 = scalar_lea.vmem %s1, %s268
        $region24: #{tpu_custom_call.1} parent=15 // pred_fallthru
          _
        // Predicated region
        $region25: #{tpu_custom_call.1} parent=15 // pred_check
          %p270 = pneg %p100
        $region26: #{tpu_custom_call.1} parent=15 // pred_check_branch
          %272 = sbr.rel (%p270) target = $region28
        $region27: #{tpu_custom_call.1} parent=15 // pred_region
          %p273 = scmp.lt.s32.totalorder %s24, 1
          %s274 = scalar_select %p273, %s24, 1
          %s275 = scalar_lea.vmem %s2, %s274
        $region28: #{tpu_custom_call.1} parent=15 // pred_fallthru
          _
        // Predicated region
        $region29: #{tpu_custom_call.1} parent=15 // pred_check
          %p276 = pneg %p126
        $region30: #{tpu_custom_call.1} parent=15 // pred_check_branch
          %278 = sbr.rel (%p276) target = $region32
        $region31: #{tpu_custom_call.1} parent=15 // pred_region
          %p279 = scmp.lt.s32.totalorder %s24, 1
          %s280 = scalar_select %p279, %s24, 1
          %s281 = smul.addr %s280, 4
          %s282 = smul.addr %s281, 4
          %s283 = scalar_lea.vmem %s3, %s282
        $region32: #{tpu_custom_call.1} parent=15 // pred_fallthru
          _
        // Predicated region
        $region33: #{tpu_custom_call.1} parent=15 // pred_check
          %p284 = pneg %p152
        $region34: #{tpu_custom_call.1} parent=15 // pred_check_branch
          %286 = sbr.rel (%p284) target = $region36
        $region35: #{tpu_custom_call.1} parent=15 // pred_region
          %p287 = scmp.lt.s32.totalorder %s24, 1
          %s288 = scalar_select %p287, %s24, 1
          %s289 = smul.addr %s288, 4
          %s290 = smul.addr %s289, 4
          %s291 = scalar_lea.vmem %s4, %s290
        $region36: #{tpu_custom_call.1} parent=15 // pred_fallthru
          _
        // Predicated region
        $region37: #{tpu_custom_call.1} parent=15 // pred_check
          %p292 = pneg %p178
        $region38: #{tpu_custom_call.1} parent=15 // pred_check_branch
          %294 = sbr.rel (%p292) target = $region40
        $region39: #{tpu_custom_call.1} parent=15 // pred_region
          %p295 = scmp.lt.s32.totalorder %s24, 1
          %s296 = scalar_select %p295, %s24, 1
          %s297 = smul.addr %s296, 4
          %s298 = smul.addr %s297, 4
          %s299 = scalar_lea.vmem %s5, %s298
        $region40: #{tpu_custom_call.1} parent=15 // pred_fallthru
          _
        // Predicated region
        $region41: #{tpu_custom_call.1} parent=15 // pred_check
          %p300 = pneg %p204
        $region42: #{tpu_custom_call.1} parent=15 // pred_check_branch
          %302 = sbr.rel (%p300) target = $region44
        $region43: #{tpu_custom_call.1} parent=15 // pred_region
          %p303 = scmp.lt.s32.totalorder %s24, 1
          %s304 = scalar_select %p303, %s24, 1
          %s305 = smul.addr %s304, 16
          %s306 = smul.addr %s305, 4
          %s307 = scalar_lea.vmem %s6, %s306
        $region44: #{tpu_custom_call.1} parent=15 // pred_fallthru
          _
      $region16: #{tpu_custom_call.1} parent=5 // pred_fallthru
        _
      %p308 = scmp.le.s32.totalorder 1, %s16
      %p309 = scmp.lt.s32.totalorder %s16, 5
      %p310 = pnand %p308, %p309
      %p311 = pneg %p310
      // Predicated region
      $region45: #{tpu_custom_call.1} parent=5 // pred_check
        _
      $region46: #{tpu_custom_call.1} parent=5 // pred_check_branch
        %313 = sbr.rel (%p310) target = $region48
      $region47: #{tpu_custom_call.1} parent=5 // pred_region
        %s314 = ssub.s32 %s16, 1
        %p315 = scmp.lt.s32.totalorder %s25, 1
        %s316 = scalar_select %p315, %s25, 1
        %s317 = smul.addr %s316, 2
        %s318 = smul.addr %s317, 8
        %s319 = scalar_lea.vmem %s0, %s318
        %p320 = pneg %p54
        %p321 = pneg %p51
        %p322 = scmp.lt.s32.totalorder %s26, 1
        %s323 = scalar_select %p322, %s26, 1
        %s324 = smul.addr %s323, 8
        %s325 = scalar_lea.vmem %s1, %s324
        %p326 = pneg %p80
        %p327 = pneg %p77
        %p328 = scmp.lt.s32.totalorder %s26, 1
        %s329 = scalar_select %p328, %s26, 1
        %s330 = scalar_lea.vmem %s2, %s329
        %p331 = pneg %p106
        %p332 = pneg %p103
        %p333 = scmp.lt.s32.totalorder %s26, 1
        %s334 = scalar_select %p333, %s26, 1
        %s335 = smul.addr %s334, 4
        %s336 = smul.addr %s335, 4
        %s337 = scalar_lea.vmem %s3, %s336
        %p338 = pneg %p132
        %p339 = pneg %p129
        %p340 = scmp.lt.s32.totalorder %s26, 1
        %s341 = scalar_select %p340, %s26, 1
        %s342 = smul.addr %s341, 4
        %s343 = smul.addr %s342, 4
        %s344 = scalar_lea.vmem %s4, %s343
        %p345 = pneg %p158
        %p346 = pneg %p155
        %p347 = scmp.lt.s32.totalorder %s26, 1
        %s348 = scalar_select %p347, %s26, 1
        %s349 = smul.addr %s348, 4
        %s350 = smul.addr %s349, 4
        %s351 = scalar_lea.vmem %s5, %s350
        %p352 = pneg %p184
        %p353 = pneg %p181
        %p354 = scmp.lt.s32.totalorder %s26, 1
        %s355 = scalar_select %p354, %s26, 1
        %s356 = smul.addr %s355, 16
        %s357 = smul.addr %s356, 4
        %s358 = scalar_lea.vmem %s6, %s357
        %p359 = pneg %p210
        %p360 = pneg %p207
        %p361 = pneg %p236
        %p362 = pneg %p233
        %s363 = sand.u32 %s223, 1
        %s364 = scalar_lea.sflag [#allocation3], %s363
        %s365 = sand.u32 %s223, 1
        %s366 = smul.addr %s365, 16
        %s367 = scalar_lea.vmem [#allocation2], %s366
        %p368 = scmp.lt.s32.totalorder %s25, 1
        %s369 = scalar_select %p368, %s25, 1
        %s370 = smul.addr %s369, 2
        %s371 = smul.addr %s370, 8
        %s372 = scalar_lea.vmem %s0, %s371
        %p373 = scmp.lt.s32.totalorder %s26, 1
        %s374 = scalar_select %p373, %s26, 1
        %s375 = smul.addr %s374, 8
        %s376 = scalar_lea.vmem %s1, %s375
        %p377 = scmp.lt.s32.totalorder %s26, 1
        %s378 = scalar_select %p377, %s26, 1
        %s379 = scalar_lea.vmem %s2, %s378
        %p380 = scmp.lt.s32.totalorder %s26, 1
        %s381 = scalar_select %p380, %s26, 1
        %s382 = smul.addr %s381, 4
        %s383 = smul.addr %s382, 4
        %s384 = scalar_lea.vmem %s3, %s383
        %p385 = scmp.lt.s32.totalorder %s26, 1
        %s386 = scalar_select %p385, %s26, 1
        %s387 = smul.addr %s386, 4
        %s388 = smul.addr %s387, 4
        %s389 = scalar_lea.vmem %s4, %s388
        %p390 = scmp.lt.s32.totalorder %s26, 1
        %s391 = scalar_select %p390, %s26, 1
        %s392 = smul.addr %s391, 4
        %s393 = smul.addr %s392, 4
        %s394 = scalar_lea.vmem %s5, %s393
        %p395 = scmp.lt.s32.totalorder %s26, 1
        %s396 = scalar_select %p395, %s26, 1
        %s397 = smul.addr %s396, 16
        %s398 = smul.addr %s397, 4
        %s399 = scalar_lea.vmem %s6, %s398
        %p401 = scmp.eq.s32.totalorder %s26, 0
        // Predicated region
        $region49: #{tpu_custom_call.1} parent=47 // pred_check
          %p402 = pneg %p401
        $region50: #{tpu_custom_call.1} parent=47 // pred_check_branch
          %404 = sbr.rel (%p402) target = $region52
        $region51: #{tpu_custom_call.1} parent=47 // pred_region
          %v405 = vld [vmem:[%s372] sm:$0xff]
          %v406 = vld [vmem:[%s372 + $0x8] sm:$0xff]
          %vm407 = vcmask 261120
          %408 = vst.msk [vmem:[%s367] sm:$0xff] %vm407, %v405
          %409 = vst.msk [vmem:[%s367 + $0x8] sm:$0xff] %vm407, %v406
        $region52: #{tpu_custom_call.1} parent=47 // pred_fallthru
          _
        %v410 = vld [vmem:[%s367] sm:$0xff]
        %v411 = vld [vmem:[%s367 + $0x8] sm:$0xff]
        %v412 = vld [vmem:[%s376] sm:$0x1]
        %v413 = vld [vmem:[%s376 + $0x1] sm:$0x1]
        %v414 = vld [vmem:[%s376 + $0x2] sm:$0x1]
        %v415 = vld [vmem:[%s376 + $0x3] sm:$0x1]
        %v416 = vld [vmem:[%s376 + $0x4] sm:$0x1]
        %v417 = vld [vmem:[%s376 + $0x5] sm:$0x1]
        %v418 = vld [vmem:[%s379] sm:$0x1]
        %vm419 = vcmask 261120
        %v420 = vsel %vm419, %v410, 0.0
        %421 = vadd.xlane.f32.xlu0 %v420
        %v422 = vpop.xlane.xlu0 %421
        %v423 = vsel %vm419, %v411, 0.0
        %424 = vadd.xlane.f32.xlu0 %v423
        %v425 = vpop.xlane.xlu0 %424
        %v426 = vrcp.pop 32.0
        %v427 = vmul.f32 %v422, %v426
        %v428 = vmul.f32 %v425, %v426
        %v429 = vsub.f32 %v410, %v427
        %v430 = vsub.f32 %v411, %v428
        %v431 = vmul.f32 %v429, %v429
        %v432 = vmul.f32 %v430, %v430
        %v433 = vsel %vm419, %v431, 0.0
        %434 = vadd.xlane.f32.xlu0 %v433
        %v435 = vpop.xlane.xlu0 %434
        %v436 = vsel %vm419, %v432, 0.0
        %437 = vadd.xlane.f32.xlu0 %v436
        %v438 = vpop.xlane.xlu0 %437
        %v439 = vmul.f32 %v435, %v426
        %v440 = vmul.f32 %v438, %v426
        %v441 = vadd.f32 %v439, 1e-05
        %v442 = vadd.f32 %v440, 1e-05
        %v443 = vrsqrt.pop %v441
        %v444 = vrsqrt.pop %v442
        %v445 = vmul.f32 %v429, %v443
        %v446 = vmul.f32 %v430, %v444
        %v447 = vlaneseq
        %v448 = vshrl.u32 %v447, 7
        %v449 = vsub.s32 0, %v448
        %v450 = vrot.slane %v412, %v449
        %v451 = vmul.f32 %v445, %v450
        %v452 = vmul.f32 %v446, %v450
        %v453 = vlaneseq
        %v454 = vshrl.u32 %v453, 7
        %v455 = vsub.s32 0, %v454
        %v456 = vrot.slane %v413, %v455
        %v457 = vadd.f32 %v451, %v456
        %v458 = vadd.f32 %v452, %v456
        %v459 = vpack.c.bf16 %v458, %v457
        %v460 = vld [vmem:[%s384] sm:$0xf]
        %v461 = vld [vmem:[%s384 + $0x4] sm:$0xf]
        %v462 = vld [vmem:[%s384 + $0x8] sm:$0xf]
        %v463 = vld [vmem:[%s384 + $0xc] sm:$0xf]
        %v468 = vunpack.c.l.b16 %v460
        %v469 = vunpack.c.l.b16 %v461
        %v470 = vunpack.c.l.b16 %v462
        %v471 = vunpack.c.l.b16 %v463
        %v472 = vpack.c.b16 %v469, %v468
        %v473 = vpack.c.b16 %v471, %v470
        %v477 = vsel %vm419, %v459, 0
        %479 = vmatprep.subr.bf16.mxu0 0
        %480 = vmatpush1.bf16.msra.mxu0 %v472
        %481 = vmatprep.subr.bf16.mxu0 0
        %482 = vmatpush1.bf16.msra.mxu0 %v473
        %483 = vmatprep.subr.bf16.mxu0 0
        %484 = vmatpush1.bf16.msra.mxu0 0
        %485 = vmatprep.subr.bf16.mxu0 0
        %486 = vmatpush1.bf16.msra.mxu0 0
        %487 = vmatprep.subr.bf16.mxu0 0
        %488 = vmatpush1.bf16.msra.mxu0 0
        %489 = vmatprep.subr.bf16.mxu0 0
        %490 = vmatpush1.bf16.msra.mxu0 0
        %491 = vmatprep.subr.bf16.mxu0 0
        %492 = vmatpush1.bf16.msra.mxu0 0
        %493 = vmatprep.subr.bf16.mxu0 0
        %494 = vmatpush1.bf16.msra.mxu0 0
        %495 = vmatprep.subr.bf16.mxu0 0
        %496 = vmatpush1.bf16.msra.mxu0 0
        %497 = vmatprep.subr.bf16.mxu0 0
        %498 = vmatpush1.bf16.msra.mxu0 0
        %499 = vmatprep.subr.bf16.mxu0 0
        %500 = vmatpush1.bf16.msra.mxu0 0
        %501 = vmatprep.subr.bf16.mxu0 0
        %502 = vmatpush1.bf16.msra.mxu0 0
        %503 = vmatprep.subr.bf16.mxu0 0
        %504 = vmatpush1.bf16.msra.mxu0 0
        %505 = vmatprep.subr.bf16.mxu0 0
        %506 = vmatpush1.bf16.msra.mxu0 0
        %507 = vmatprep.subr.bf16.mxu0 0
        %508 = vmatpush1.bf16.msra.mxu0 0
        %509 = vmatprep.subr.bf16.mxu0 0
        %510 = vmatpush1.bf16.msra.mxu0 0
        %511 = vmatprep.mubr.bf16.mxu0 0
        %512 = vmatmul.mubr.bf16.gmra.mrb[0].mxu0 %v477
        %v513 = vpop.f32.mrb[0].mxu0
        %v514 = vadd.f32 0.0, %v513
        %v515 = vpop.f32.mrb[0].mxu0
        %v516 = vpop.f32.mrb[0].mxu0
        %v517 = vadd.f32 0.0, %v516
        %v518 = vpop.f32.mrb[0].mxu0
        %519 = vdwg.mxu0
        %v520 = vpack.c.bf16 %v517, %v514
        %522 = vrot.lane.b32.xlu0 %v520, 96
        %v523 = vpop.permute.xlu0 %522
        %vm524 = vcmask 64512
        %v526 = vsel %vm524, %v520, 0
        %v529 = vsel %vm524, %v523, 0
        %531 = vmatprep.subr.bf16.mxu0 0
        %532 = vmatpush1.bf16.xpose.msra.mxu0 %v529
        %533 = vmatprep.subr.bf16.mxu0 0
        %534 = vmatpush1.bf16.xpose.msra.mxu0 0
        %535 = vmatprep.subr.bf16.mxu0 0
        %536 = vmatpush1.bf16.xpose.msra.mxu0 0
        %537 = vmatprep.subr.bf16.mxu0 0
        %538 = vmatpush1.bf16.xpose.msra.mxu0 0
        %539 = vmatprep.subr.bf16.mxu0 0
        %540 = vmatpush1.bf16.xpose.msra.mxu0 0
        %541 = vmatprep.subr.bf16.mxu0 0
        %542 = vmatpush1.bf16.xpose.msra.mxu0 0
        %543 = vmatprep.subr.bf16.mxu0 0
        %544 = vmatpush1.bf16.xpose.msra.mxu0 0
        %545 = vmatprep.subr.bf16.mxu0 0
        %546 = vmatpush1.bf16.xpose.msra.mxu0 0
        %547 = vmatprep.subr.bf16.mxu0 0
        %548 = vmatpush1.bf16.xpose.msra.mxu0 0
        %549 = vmatprep.subr.bf16.mxu0 0
        %550 = vmatpush1.bf16.xpose.msra.mxu0 0
        %551 = vmatprep.subr.bf16.mxu0 0
        %552 = vmatpush1.bf16.xpose.msra.mxu0 0
        %553 = vmatprep.subr.bf16.mxu0 0
        %554 = vmatpush1.bf16.xpose.msra.mxu0 0
        %555 = vmatprep.subr.bf16.mxu0 0
        %556 = vmatpush1.bf16.xpose.msra.mxu0 0
        %557 = vmatprep.subr.bf16.mxu0 0
        %558 = vmatpush1.bf16.xpose.msra.mxu0 0
        %559 = vmatprep.subr.bf16.mxu0 0
        %560 = vmatpush1.bf16.xpose.msra.mxu0 0
        %561 = vmatprep.subr.bf16.mxu0 0
        %562 = vmatpush1.bf16.xpose.msra.mxu0 0
        %563 = vmatprep.mubr.bf16.mxu0 0
        %564 = vmatmul.mubr.bf16.gmra.mrb[0].mxu0 %v526
        %v565 = vpop.f32.mrb[0].mxu0
        %v566 = vadd.f32 0.0, %v565
        %v567 = vpop.f32.mrb[0].mxu0
        %v568 = vpop.f32.mrb[0].mxu0
        %v569 = vadd.f32 0.0, %v568
        %v570 = vpop.f32.mrb[0].mxu0
        %571 = vdwg.mxu0
        %vm572 = vcmask 130048
        %v573 = vsel %vm572, %v566, -inf
        %574 = vmax.xlane.f32.xlu0 %v573
        %v575 = vpop.xlane.xlu0 %574
        %v576 = vsel %vm572, %v569, -inf
        %577 = vmax.xlane.f32.xlu0 %v576
        %v578 = vpop.xlane.xlu0 %577
        %v579 = vsub.f32 %v566, %v575
        %v580 = vsub.f32 %v569, %v578
        %v581 = vmul.f32 %v579, 1.442695
        %v582 = vpow.pop %v581
        %v583 = vmul.f32 %v580, 1.442695
        %v584 = vpow.pop %v583
        %v585 = vsel %vm572, %v582, 0.0
        %586 = vadd.xlane.f32.xlu0 %v585
        %v587 = vpop.xlane.xlu0 %586
        %v588 = vsel %vm572, %v584, 0.0
        %589 = vadd.xlane.f32.xlu0 %v588
        %v590 = vpop.xlane.xlu0 %589
        %v591 = vrcp.pop %v587
        %v592 = vrcp.pop %v590
        %v593 = vmul.f32 %v582, %v591
        %v594 = vmul.f32 %v584, %v592
        %v595 = vpack.c.bf16 %v594, %v593
        %596 = vrot.lane.b32.xlu0 %v520, 64
        %v597 = vpop.permute.xlu0 %596
        %v600 = vsel %vm572, %v595, 0
        %602 = vmatprep.subr.bf16.mxu0 0
        %603 = vmatpush1.bf16.msra.mxu0 %v597
        %604 = vmatprep.subr.bf16.mxu0 0
        %605 = vmatpush1.bf16.msra.mxu0 0
        %606 = vmatprep.subr.bf16.mxu0 0
        %607 = vmatpush1.bf16.msra.mxu0 0
        %608 = vmatprep.subr.bf16.mxu0 0
        %609 = vmatpush1.bf16.msra.mxu0 0
        %610 = vmatprep.subr.bf16.mxu0 0
        %611 = vmatpush1.bf16.msra.mxu0 0
        %612 = vmatprep.subr.bf16.mxu0 0
        %613 = vmatpush1.bf16.msra.mxu0 0
        %614 = vmatprep.subr.bf16.mxu0 0
        %615 = vmatpush1.bf16.msra.mxu0 0
        %616 = vmatprep.subr.bf16.mxu0 0
        %617 = vmatpush1.bf16.msra.mxu0 0
        %618 = vmatprep.subr.bf16.mxu0 0
        %619 = vmatpush1.bf16.msra.mxu0 0
        %620 = vmatprep.subr.bf16.mxu0 0
        %621 = vmatpush1.bf16.msra.mxu0 0
        %622 = vmatprep.subr.bf16.mxu0 0
        %623 = vmatpush1.bf16.msra.mxu0 0
        %624 = vmatprep.subr.bf16.mxu0 0
        %625 = vmatpush1.bf16.msra.mxu0 0
        %626 = vmatprep.subr.bf16.mxu0 0
        %627 = vmatpush1.bf16.msra.mxu0 0
        %628 = vmatprep.subr.bf16.mxu0 0
        %629 = vmatpush1.bf16.msra.mxu0 0
        %630 = vmatprep.subr.bf16.mxu0 0
        %631 = vmatpush1.bf16.msra.mxu0 0
        %632 = vmatprep.subr.bf16.mxu0 0
        %633 = vmatpush1.bf16.msra.mxu0 0
        %634 = vmatprep.mubr.bf16.mxu0 0
        %635 = vmatmul.mubr.bf16.gmra.mrb[0].mxu0 %v600
        %v636 = vpop.f32.mrb[0].mxu0
        %v637 = vadd.f32 0.0, %v636
        %v638 = vpop.f32.mrb[0].mxu0
        %v639 = vpop.f32.mrb[0].mxu0
        %v640 = vadd.f32 0.0, %v639
        %v641 = vpop.f32.mrb[0].mxu0
        %642 = vdwg.mxu0
        %643 = vrot.lane.b32.xlu0 %v520, 120
        %v644 = vpop.permute.xlu0 %643
        %645 = vrot.lane.b32.xlu0 %v520, 88
        %v646 = vpop.permute.xlu0 %645
        %v648 = vsel %vm524, %v644, 0
        %v651 = vsel %vm524, %v646, 0
        %653 = vmatprep.subr.bf16.mxu0 0
        %654 = vmatpush1.bf16.xpose.msra.mxu0 %v651
        %655 = vmatprep.subr.bf16.mxu0 0
        %656 = vmatpush1.bf16.xpose.msra.mxu0 0
        %657 = vmatprep.subr.bf16.mxu0 0
        %658 = vmatpush1.bf16.xpose.msra.mxu0 0
        %659 = vmatprep.subr.bf16.mxu0 0
        %660 = vmatpush1.bf16.xpose.msra.mxu0 0
        %661 = vmatprep.subr.bf16.mxu0 0
        %662 = vmatpush1.bf16.xpose.msra.mxu0 0
        %663 = vmatprep.subr.bf16.mxu0 0
        %664 = vmatpush1.bf16.xpose.msra.mxu0 0
        %665 = vmatprep.subr.bf16.mxu0 0
        %666 = vmatpush1.bf16.xpose.msra.mxu0 0
        %667 = vmatprep.subr.bf16.mxu0 0
        %668 = vmatpush1.bf16.xpose.msra.mxu0 0
        %669 = vmatprep.subr.bf16.mxu0 0
        %670 = vmatpush1.bf16.xpose.msra.mxu0 0
        %671 = vmatprep.subr.bf16.mxu0 0
        %672 = vmatpush1.bf16.xpose.msra.mxu0 0
        %673 = vmatprep.subr.bf16.mxu0 0
        %674 = vmatpush1.bf16.xpose.msra.mxu0 0
        %675 = vmatprep.subr.bf16.mxu0 0
        %676 = vmatpush1.bf16.xpose.msra.mxu0 0
        %677 = vmatprep.subr.bf16.mxu0 0
        %678 = vmatpush1.bf16.xpose.msra.mxu0 0
        %679 = vmatprep.subr.bf16.mxu0 0
        %680 = vmatpush1.bf16.xpose.msra.mxu0 0
        %681 = vmatprep.subr.bf16.mxu0 0
        %682 = vmatpush1.bf16.xpose.msra.mxu0 0
        %683 = vmatprep.subr.bf16.mxu0 0
        %684 = vmatpush1.bf16.xpose.msra.mxu0 0
        %685 = vmatprep.mubr.bf16.mxu0 0
        %686 = vmatmul.mubr.bf16.gmra.mrb[0].mxu0 %v648
        %v687 = vpop.f32.mrb[0].mxu0
        %v688 = vadd.f32 0.0, %v687
        %v689 = vpop.f32.mrb[0].mxu0
        %v690 = vpop.f32.mrb[0].mxu0
        %v691 = vadd.f32 0.0, %v690
        %v692 = vpop.f32.mrb[0].mxu0
        %693 = vdwg.mxu0
        %v694 = vsel %vm572, %v688, -inf
        %695 = vmax.xlane.f32.xlu0 %v694
        %v696 = vpop.xlane.xlu0 %695
        %v697 = vsel %vm572, %v691, -inf
        %698 = vmax.xlane.f32.xlu0 %v697
        %v699 = vpop.xlane.xlu0 %698
        %v700 = vsub.f32 %v688, %v696
        %v701 = vsub.f32 %v691, %v699
        %v702 = vmul.f32 %v700, 1.442695
        %v703 = vpow.pop %v702
        %v704 = vmul.f32 %v701, 1.442695
        %v705 = vpow.pop %v704
        %v706 = vsel %vm572, %v703, 0.0
        %707 = vadd.xlane.f32.xlu0 %v706
        %v708 = vpop.xlane.xlu0 %707
        %v709 = vsel %vm572, %v705, 0.0
        %710 = vadd.xlane.f32.xlu0 %v709
        %v711 = vpop.xlane.xlu0 %710
        %v712 = vrcp.pop %v708
        %v713 = vrcp.pop %v711
        %v714 = vmul.f32 %v703, %v712
        %v715 = vmul.f32 %v705, %v713
        %v716 = vpack.c.bf16 %v715, %v714
        %717 = vrot.lane.b32.xlu0 %v520, 56
        %v718 = vpop.permute.xlu0 %717
        %v721 = vsel %vm572, %v716, 0
        %723 = vmatprep.subr.bf16.mxu0 0
        %724 = vmatpush1.bf16.msra.mxu0 %v718
        %725 = vmatprep.subr.bf16.mxu0 0
        %726 = vmatpush1.bf16.msra.mxu0 0
        %727 = vmatprep.subr.bf16.mxu0 0
        %728 = vmatpush1.bf16.msra.mxu0 0
        %729 = vmatprep.subr.bf16.mxu0 0
        %730 = vmatpush1.bf16.msra.mxu0 0
        %731 = vmatprep.subr.bf16.mxu0 0
        %732 = vmatpush1.bf16.msra.mxu0 0
        %733 = vmatprep.subr.bf16.mxu0 0
        %734 = vmatpush1.bf16.msra.mxu0 0
        %735 = vmatprep.subr.bf16.mxu0 0
        %736 = vmatpush1.bf16.msra.mxu0 0
        %737 = vmatprep.subr.bf16.mxu0 0
        %738 = vmatpush1.bf16.msra.mxu0 0
        %739 = vmatprep.subr.bf16.mxu0 0
        %740 = vmatpush1.bf16.msra.mxu0 0
        %741 = vmatprep.subr.bf16.mxu0 0
        %742 = vmatpush1.bf16.msra.mxu0 0
        %743 = vmatprep.subr.bf16.mxu0 0
        %744 = vmatpush1.bf16.msra.mxu0 0
        %745 = vmatprep.subr.bf16.mxu0 0
        %746 = vmatpush1.bf16.msra.mxu0 0
        %747 = vmatprep.subr.bf16.mxu0 0
        %748 = vmatpush1.bf16.msra.mxu0 0
        %749 = vmatprep.subr.bf16.mxu0 0
        %750 = vmatpush1.bf16.msra.mxu0 0
        %751 = vmatprep.subr.bf16.mxu0 0
        %752 = vmatpush1.bf16.msra.mxu0 0
        %753 = vmatprep.subr.bf16.mxu0 0
        %754 = vmatpush1.bf16.msra.mxu0 0
        %755 = vmatprep.mubr.bf16.mxu0 0
        %756 = vmatmul.mubr.bf16.gmra.mrb[0].mxu0 %v721
        %v757 = vpop.f32.mrb[0].mxu0
        %v758 = vadd.f32 0.0, %v757
        %v759 = vpop.f32.mrb[0].mxu0
        %v760 = vpop.f32.mrb[0].mxu0
        %v761 = vadd.f32 0.0, %v760
        %v762 = vpop.f32.mrb[0].mxu0
        %763 = vdwg.mxu0
        %764 = vrot.lane.b32.xlu0 %v520, 112
        %v765 = vpop.permute.xlu0 %764
        %766 = vrot.lane.b32.xlu0 %v520, 80
        %v767 = vpop.permute.xlu0 %766
        %v769 = vsel %vm524, %v765, 0
        %v772 = vsel %vm524, %v767, 0
        %774 = vmatprep.subr.bf16.mxu0 0
        %775 = vmatpush1.bf16.xpose.msra.mxu0 %v772
        %776 = vmatprep.subr.bf16.mxu0 0
        %777 = vmatpush1.bf16.xpose.msra.mxu0 0
        %778 = vmatprep.subr.bf16.mxu0 0
        %779 = vmatpush1.bf16.xpose.msra.mxu0 0
        %780 = vmatprep.subr.bf16.mxu0 0
        %781 = vmatpush1.bf16.xpose.msra.mxu0 0
        %782 = vmatprep.subr.bf16.mxu0 0
        %783 = vmatpush1.bf16.xpose.msra.mxu0 0
        %784 = vmatprep.subr.bf16.mxu0 0
        %785 = vmatpush1.bf16.xpose.msra.mxu0 0
        %786 = vmatprep.subr.bf16.mxu0 0
        %787 = vmatpush1.bf16.xpose.msra.mxu0 0
        %788 = vmatprep.subr.bf16.mxu0 0
        %789 = vmatpush1.bf16.xpose.msra.mxu0 0
        %790 = vmatprep.subr.bf16.mxu0 0
        %791 = vmatpush1.bf16.xpose.msra.mxu0 0
        %792 = vmatprep.subr.bf16.mxu0 0
        %793 = vmatpush1.bf16.xpose.msra.mxu0 0
        %794 = vmatprep.subr.bf16.mxu0 0
        %795 = vmatpush1.bf16.xpose.msra.mxu0 0
        %796 = vmatprep.subr.bf16.mxu0 0
        %797 = vmatpush1.bf16.xpose.msra.mxu0 0
        %798 = vmatprep.subr.bf16.mxu0 0
        %799 = vmatpush1.bf16.xpose.msra.mxu0 0
        %800 = vmatprep.subr.bf16.mxu0 0
        %801 = vmatpush1.bf16.xpose.msra.mxu0 0
        %802 = vmatprep.subr.bf16.mxu0 0
        %803 = vmatpush1.bf16.xpose.msra.mxu0 0
        %804 = vmatprep.subr.bf16.mxu0 0
        %805 = vmatpush1.bf16.xpose.msra.mxu0 0
        %806 = vmatprep.mubr.bf16.mxu0 0
        %807 = vmatmul.mubr.bf16.gmra.mrb[0].mxu0 %v769
        %v808 = vpop.f32.mrb[0].mxu0
        %v809 = vadd.f32 0.0, %v808
        %v810 = vpop.f32.mrb[0].mxu0
        %v811 = vpop.f32.mrb[0].mxu0
        %v812 = vadd.f32 0.0, %v811
        %v813 = vpop.f32.mrb[0].mxu0
        %814 = vdwg.mxu0
        %v815 = vsel %vm572, %v809, -inf
        %816 = vmax.xlane.f32.xlu0 %v815
        %v817 = vpop.xlane.xlu0 %816
        %v818 = vsel %vm572, %v812, -inf
        %819 = vmax.xlane.f32.xlu0 %v818
        %v820 = vpop.xlane.xlu0 %819
        %v821 = vsub.f32 %v809, %v817
        %v822 = vsub.f32 %v812, %v820
        %v823 = vmul.f32 %v821, 1.442695
        %v824 = vpow.pop %v823
        %v825 = vmul.f32 %v822, 1.442695
        %v826 = vpow.pop %v825
        %v827 = vsel %vm572, %v824, 0.0
        %828 = vadd.xlane.f32.xlu0 %v827
        %v829 = vpop.xlane.xlu0 %828
        %v830 = vsel %vm572, %v826, 0.0
        %831 = vadd.xlane.f32.xlu0 %v830
        %v832 = vpop.xlane.xlu0 %831
        %v833 = vrcp.pop %v829
        %v834 = vrcp.pop %v832
        %v835 = vmul.f32 %v824, %v833
        %v836 = vmul.f32 %v826, %v834
        %v837 = vpack.c.bf16 %v836, %v835
        %838 = vrot.lane.b32.xlu0 %v520, 48
        %v839 = vpop.permute.xlu0 %838
        %v842 = vsel %vm572, %v837, 0
        %844 = vmatprep.subr.bf16.mxu0 0
        %845 = vmatpush1.bf16.msra.mxu0 %v839
        %846 = vmatprep.subr.bf16.mxu0 0
        %847 = vmatpush1.bf16.msra.mxu0 0
        %848 = vmatprep.subr.bf16.mxu0 0
        %849 = vmatpush1.bf16.msra.mxu0 0
        %850 = vmatprep.subr.bf16.mxu0 0
        %851 = vmatpush1.bf16.msra.mxu0 0
        %852 = vmatprep.subr.bf16.mxu0 0
        %853 = vmatpush1.bf16.msra.mxu0 0
        %854 = vmatprep.subr.bf16.mxu0 0
        %855 = vmatpush1.bf16.msra.mxu0 0
        %856 = vmatprep.subr.bf16.mxu0 0
        %857 = vmatpush1.bf16.msra.mxu0 0
        %858 = vmatprep.subr.bf16.mxu0 0
        %859 = vmatpush1.bf16.msra.mxu0 0
        %860 = vmatprep.subr.bf16.mxu0 0
        %861 = vmatpush1.bf16.msra.mxu0 0
        %862 = vmatprep.subr.bf16.mxu0 0
        %863 = vmatpush1.bf16.msra.mxu0 0
        %864 = vmatprep.subr.bf16.mxu0 0
        %865 = vmatpush1.bf16.msra.mxu0 0
        %866 = vmatprep.subr.bf16.mxu0 0
        %867 = vmatpush1.bf16.msra.mxu0 0
        %868 = vmatprep.subr.bf16.mxu0 0
        %869 = vmatpush1.bf16.msra.mxu0 0
        %870 = vmatprep.subr.bf16.mxu0 0
        %871 = vmatpush1.bf16.msra.mxu0 0
        %872 = vmatprep.subr.bf16.mxu0 0
        %873 = vmatpush1.bf16.msra.mxu0 0
        %874 = vmatprep.subr.bf16.mxu0 0
        %875 = vmatpush1.bf16.msra.mxu0 0
        %876 = vmatprep.mubr.bf16.mxu0 0
        %877 = vmatmul.mubr.bf16.gmra.mrb[0].mxu0 %v842
        %v878 = vpop.f32.mrb[0].mxu0
        %v879 = vadd.f32 0.0, %v878
        %v880 = vpop.f32.mrb[0].mxu0
        %v881 = vpop.f32.mrb[0].mxu0
        %v882 = vadd.f32 0.0, %v881
        %v883 = vpop.f32.mrb[0].mxu0
        %884 = vdwg.mxu0
        %885 = vrot.lane.b32.xlu0 %v520, 104
        %v886 = vpop.permute.xlu0 %885
        %887 = vrot.lane.b32.xlu0 %v520, 72
        %v888 = vpop.permute.xlu0 %887
        %v890 = vsel %vm524, %v886, 0
        %v893 = vsel %vm524, %v888, 0
        %895 = vmatprep.subr.bf16.mxu0 0
        %896 = vmatpush1.bf16.xpose.msra.mxu0 %v893
        %897 = vmatprep.subr.bf16.mxu0 0
        %898 = vmatpush1.bf16.xpose.msra.mxu0 0
        %899 = vmatprep.subr.bf16.mxu0 0
        %900 = vmatpush1.bf16.xpose.msra.mxu0 0
        %901 = vmatprep.subr.bf16.mxu0 0
        %902 = vmatpush1.bf16.xpose.msra.mxu0 0
        %903 = vmatprep.subr.bf16.mxu0 0
        %904 = vmatpush1.bf16.xpose.msra.mxu0 0
        %905 = vmatprep.subr.bf16.mxu0 0
        %906 = vmatpush1.bf16.xpose.msra.mxu0 0
        %907 = vmatprep.subr.bf16.mxu0 0
        %908 = vmatpush1.bf16.xpose.msra.mxu0 0
        %909 = vmatprep.subr.bf16.mxu0 0
        %910 = vmatpush1.bf16.xpose.msra.mxu0 0
        %911 = vmatprep.subr.bf16.mxu0 0
        %912 = vmatpush1.bf16.xpose.msra.mxu0 0
        %913 = vmatprep.subr.bf16.mxu0 0
        %914 = vmatpush1.bf16.xpose.msra.mxu0 0
        %915 = vmatprep.subr.bf16.mxu0 0
        %916 = vmatpush1.bf16.xpose.msra.mxu0 0
        %917 = vmatprep.subr.bf16.mxu0 0
        %918 = vmatpush1.bf16.xpose.msra.mxu0 0
        %919 = vmatprep.subr.bf16.mxu0 0
        %920 = vmatpush1.bf16.xpose.msra.mxu0 0
        %921 = vmatprep.subr.bf16.mxu0 0
        %922 = vmatpush1.bf16.xpose.msra.mxu0 0
        %923 = vmatprep.subr.bf16.mxu0 0
        %924 = vmatpush1.bf16.xpose.msra.mxu0 0
        %925 = vmatprep.subr.bf16.mxu0 0
        %926 = vmatpush1.bf16.xpose.msra.mxu0 0
        %927 = vmatprep.mubr.bf16.mxu0 0
        %928 = vmatmul.mubr.bf16.gmra.mrb[0].mxu0 %v890
        %v929 = vpop.f32.mrb[0].mxu0
        %v930 = vadd.f32 0.0, %v929
        %v931 = vpop.f32.mrb[0].mxu0
        %v932 = vpop.f32.mrb[0].mxu0
        %v933 = vadd.f32 0.0, %v932
        %v934 = vpop.f32.mrb[0].mxu0
        %935 = vdwg.mxu0
        %v936 = vsel %vm572, %v930, -inf
        %937 = vmax.xlane.f32.xlu0 %v936
        %v938 = vpop.xlane.xlu0 %937
        %v939 = vsel %vm572, %v933, -inf
        %940 = vmax.xlane.f32.xlu0 %v939
        %v941 = vpop.xlane.xlu0 %940
        %v942 = vsub.f32 %v930, %v938
        %v943 = vsub.f32 %v933, %v941
        %v944 = vmul.f32 %v942, 1.442695
        %v945 = vpow.pop %v944
        %v946 = vmul.f32 %v943, 1.442695
        %v947 = vpow.pop %v946
        %v948 = vsel %vm572, %v945, 0.0
        %949 = vadd.xlane.f32.xlu0 %v948
        %v950 = vpop.xlane.xlu0 %949
        %v951 = vsel %vm572, %v947, 0.0
        %952 = vadd.xlane.f32.xlu0 %v951
        %v953 = vpop.xlane.xlu0 %952
        %v954 = vrcp.pop %v950
        %v955 = vrcp.pop %v953
        %v956 = vmul.f32 %v945, %v954
        %v957 = vmul.f32 %v947, %v955
        %v958 = vpack.c.bf16 %v957, %v956
        %959 = vrot.lane.b32.xlu0 %v520, 40
        %v960 = vpop.permute.xlu0 %959
        %v963 = vsel %vm572, %v958, 0
        %965 = vmatprep.subr.bf16.mxu0 0
        %966 = vmatpush1.bf16.msra.mxu0 %v960
        %967 = vmatprep.subr.bf16.mxu0 0
        %968 = vmatpush1.bf16.msra.mxu0 0
        %969 = vmatprep.subr.bf16.mxu0 0
        %970 = vmatpush1.bf16.msra.mxu0 0
        %971 = vmatprep.subr.bf16.mxu0 0
        %972 = vmatpush1.bf16.msra.mxu0 0
        %973 = vmatprep.subr.bf16.mxu0 0
        %974 = vmatpush1.bf16.msra.mxu0 0
        %975 = vmatprep.subr.bf16.mxu0 0
        %976 = vmatpush1.bf16.msra.mxu0 0
        %977 = vmatprep.subr.bf16.mxu0 0
        %978 = vmatpush1.bf16.msra.mxu0 0
        %979 = vmatprep.subr.bf16.mxu0 0
        %980 = vmatpush1.bf16.msra.mxu0 0
        %981 = vmatprep.subr.bf16.mxu0 0
        %982 = vmatpush1.bf16.msra.mxu0 0
        %983 = vmatprep.subr.bf16.mxu0 0
        %984 = vmatpush1.bf16.msra.mxu0 0
        %985 = vmatprep.subr.bf16.mxu0 0
        %986 = vmatpush1.bf16.msra.mxu0 0
        %987 = vmatprep.subr.bf16.mxu0 0
        %988 = vmatpush1.bf16.msra.mxu0 0
        %989 = vmatprep.subr.bf16.mxu0 0
        %990 = vmatpush1.bf16.msra.mxu0 0
        %991 = vmatprep.subr.bf16.mxu0 0
        %992 = vmatpush1.bf16.msra.mxu0 0
        %993 = vmatprep.subr.bf16.mxu0 0
        %994 = vmatpush1.bf16.msra.mxu0 0
        %995 = vmatprep.subr.bf16.mxu0 0
        %996 = vmatpush1.bf16.msra.mxu0 0
        %997 = vmatprep.mubr.bf16.mxu0 0
        %998 = vmatmul.mubr.bf16.gmra.mrb[0].mxu0 %v963
        %v999 = vpop.f32.mrb[0].mxu0
        %v1000 = vadd.f32 0.0, %v999
        %v1001 = vpop.f32.mrb[0].mxu0
        %v1002 = vpop.f32.mrb[0].mxu0
        %v1003 = vadd.f32 0.0, %v1002
        %v1004 = vpop.f32.mrb[0].mxu0
        %1005 = vdwg.mxu0
        %1008 = vrot.lane.b32.xlu0 %v758, 8
        %v1009 = vpop.permute.xlu0 %1008
        %1010 = vrot.lane.b32.xlu0 %v761, 8
        %v1011 = vpop.permute.xlu0 %1010
        %1016 = vrot.lane.b32.xlu0 %v879, 16
        %v1017 = vpop.permute.xlu0 %1016
        %1018 = vrot.lane.b32.xlu0 %v882, 16
        %v1019 = vpop.permute.xlu0 %1018
        %1024 = vrot.lane.b32.xlu0 %v1000, 24
        %v1025 = vpop.permute.xlu0 %1024
        %1026 = vrot.lane.b32.xlu0 %v1003, 24
        %v1027 = vpop.permute.xlu0 %1026
        %v1030 = vsel %vm524, %v637, %v1009
        %v1031 = vsel %vm524, %v640, %v1011
        %v1032 = vsel %vm572, %v1030, %v1017
        %v1033 = vsel %vm572, %v1031, %v1019
        %vm1034 = vcmask 195584
        %v1035 = vsel %vm1034, %v1032, %v1025
        %v1036 = vsel %vm1034, %v1033, %v1027
        %v1037 = vpack.c.bf16 %v1036, %v1035
        %v1038 = vld [vmem:[%s389] sm:$0xf]
        %v1039 = vld [vmem:[%s389 + $0x4] sm:$0xf]
        %v1040 = vld [vmem:[%s389 + $0x8] sm:$0xf]
        %v1041 = vld [vmem:[%s389 + $0xc] sm:$0xf]
        %v1042 = vlaneseq
        %v1043 = vshrl.u32 %v1042, 7
        %v1044 = vsub.s32 0, %v1043
        %v1045 = vrot.slane %v414, %v1044
        %v1050 = vunpack.c.l.b16 %v1038
        %v1051 = vunpack.c.l.b16 %v1039
        %v1052 = vunpack.c.l.b16 %v1040
        %v1053 = vunpack.c.l.b16 %v1041
        %v1054 = vpack.c.b16 %v1051, %v1050
        %v1055 = vpack.c.b16 %v1053, %v1052
        %v1059 = vsel %vm419, %v1037, 0
        %1061 = vmatprep.subr.bf16.mxu0 0
        %1062 = vmatpush1.bf16.msra.mxu0 %v1054
        %1063 = vmatprep.subr.bf16.mxu0 0
        %1064 = vmatpush1.bf16.msra.mxu0 %v1055
        %1065 = vmatprep.subr.bf16.mxu0 0
        %1066 = vmatpush1.bf16.msra.mxu0 0
        %1067 = vmatprep.subr.bf16.mxu0 0
        %1068 = vmatpush1.bf16.msra.mxu0 0
        %1069 = vmatprep.subr.bf16.mxu0 0
        %1070 = vmatpush1.bf16.msra.mxu0 0
        %1071 = vmatprep.subr.bf16.mxu0 0
        %1072 = vmatpush1.bf16.msra.mxu0 0
        %1073 = vmatprep.subr.bf16.mxu0 0
        %1074 = vmatpush1.bf16.msra.mxu0 0
        %1075 = vmatprep.subr.bf16.mxu0 0
        %1076 = vmatpush1.bf16.msra.mxu0 0
        %1077 = vmatprep.subr.bf16.mxu0 0
        %1078 = vmatpush1.bf16.msra.mxu0 0
        %1079 = vmatprep.subr.bf16.mxu0 0
        %1080 = vmatpush1.bf16.msra.mxu0 0
        %1081 = vmatprep.subr.bf16.mxu0 0
        %1082 = vmatpush1.bf16.msra.mxu0 0
        %1083 = vmatprep.subr.bf16.mxu0 0
        %1084 = vmatpush1.bf16.msra.mxu0 0
        %1085 = vmatprep.subr.bf16.mxu0 0
        %1086 = vmatpush1.bf16.msra.mxu0 0
        %1087 = vmatprep.subr.bf16.mxu0 0
        %1088 = vmatpush1.bf16.msra.mxu0 0
        %1089 = vmatprep.subr.bf16.mxu0 0
        %1090 = vmatpush1.bf16.msra.mxu0 0
        %1091 = vmatprep.subr.bf16.mxu0 0
        %1092 = vmatpush1.bf16.msra.mxu0 0
        %1093 = vmatprep.mubr.bf16.mxu0 0
        %1094 = vmatmul.mubr.bf16.gmra.mrb[0].mxu0 %v1059
        %v1095 = vpop.f32.mrb[0].mxu0
        %v1096 = vadd.f32 %v1045, %v1095
        %v1097 = vpop.f32.mrb[0].mxu0
        %v1098 = vpop.f32.mrb[0].mxu0
        %v1099 = vadd.f32 %v1045, %v1098
        %v1100 = vpop.f32.mrb[0].mxu0
        %1101 = vdwg.mxu0
        %v1102 = vadd.f32 %v410, %v1096
        %v1103 = vadd.f32 %v411, %v1099
        %v1104 = vsel %vm419, %v1102, 0.0
        %1105 = vadd.xlane.f32.xlu0 %v1104
        %v1106 = vpop.xlane.xlu0 %1105
        %v1107 = vsel %vm419, %v1103, 0.0
        %1108 = vadd.xlane.f32.xlu0 %v1107
        %v1109 = vpop.xlane.xlu0 %1108
        %v1110 = vmul.f32 %v1106, %v426
        %v1111 = vmul.f32 %v1109, %v426
        %v1112 = vsub.f32 %v1102, %v1110
        %v1113 = vsub.f32 %v1103, %v1111
        %v1114 = vmul.f32 %v1112, %v1112
        %v1115 = vmul.f32 %v1113, %v1113
        %v1116 = vsel %vm419, %v1114, 0.0
        %1117 = vadd.xlane.f32.xlu0 %v1116
        %v1118 = vpop.xlane.xlu0 %1117
        %v1119 = vsel %vm419, %v1115, 0.0
        %1120 = vadd.xlane.f32.xlu0 %v1119
        %v1121 = vpop.xlane.xlu0 %1120
        %v1122 = vmul.f32 %v1118, %v426
        %v1123 = vmul.f32 %v1121, %v426
        %v1124 = vadd.f32 %v1122, 1e-05
        %v1125 = vadd.f32 %v1123, 1e-05
        %v1126 = vrsqrt.pop %v1124
        %v1127 = vrsqrt.pop %v1125
        %v1128 = vmul.f32 %v1112, %v1126
        %v1129 = vmul.f32 %v1113, %v1127
        %v1130 = vlaneseq
        %v1131 = vshrl.u32 %v1130, 7
        %v1132 = vsub.s32 0, %v1131
        %v1133 = vrot.slane %v415, %v1132
        %v1134 = vmul.f32 %v1128, %v1133
        %v1135 = vmul.f32 %v1129, %v1133
        %v1136 = vlaneseq
        %v1137 = vshrl.u32 %v1136, 7
        %v1138 = vsub.s32 0, %v1137
        %v1139 = vrot.slane %v416, %v1138
        %v1140 = vadd.f32 %v1134, %v1139
        %v1141 = vadd.f32 %v1135, %v1139
        %v1142 = vpack.c.bf16 %v1141, %v1140
        %v1143 = vld [vmem:[%s394] sm:$0xf]
        %v1144 = vld [vmem:[%s394 + $0x4] sm:$0xf]
        %v1145 = vld [vmem:[%s394 + $0x8] sm:$0xf]
        %v1146 = vld [vmem:[%s394 + $0xc] sm:$0xf]
        %v1148 = vlaneseq
        %v1149 = vshrl.u32 %v1148, 7
        %v1150 = vsub.s32 0, %v1149
        %v1151 = vrot.slane %v418, %v1150
        %v1157 = vunpack.c.l.b16 %v1143
        %v1158 = vunpack.c.l.b16 %v1144
        %v1159 = vunpack.c.l.b16 %v1145
        %v1160 = vunpack.c.l.b16 %v1146
        %v1161 = vpack.c.b16 %v1158, %v1157
        %v1162 = vpack.c.b16 %v1160, %v1159
        %v1166 = vsel %vm419, %v1142, 0
        %1168 = vmatprep.subr.bf16.mxu0 0
        %1169 = vmatpush1.bf16.msra.mxu0 %v1161
        %1170 = vmatprep.subr.bf16.mxu0 0
        %1171 = vmatpush1.bf16.msra.mxu0 %v1162
        %1172 = vmatprep.subr.bf16.mxu0 0
        %1173 = vmatpush1.bf16.msra.mxu0 0
        %1174 = vmatprep.subr.bf16.mxu0 0
        %1175 = vmatpush1.bf16.msra.mxu0 0
        %1176 = vmatprep.subr.bf16.mxu0 0
        %1177 = vmatpush1.bf16.msra.mxu0 0
        %1178 = vmatprep.subr.bf16.mxu0 0
        %1179 = vmatpush1.bf16.msra.mxu0 0
        %1180 = vmatprep.subr.bf16.mxu0 0
        %1181 = vmatpush1.bf16.msra.mxu0 0
        %1182 = vmatprep.subr.bf16.mxu0 0
        %1183 = vmatpush1.bf16.msra.mxu0 0
        %1184 = vmatprep.subr.bf16.mxu0 0
        %1185 = vmatpush1.bf16.msra.mxu0 0
        %1186 = vmatprep.subr.bf16.mxu0 0
        %1187 = vmatpush1.bf16.msra.mxu0 0
        %1188 = vmatprep.subr.bf16.mxu0 0
        %1189 = vmatpush1.bf16.msra.mxu0 0
        %1190 = vmatprep.subr.bf16.mxu0 0
        %1191 = vmatpush1.bf16.msra.mxu0 0
        %1192 = vmatprep.subr.bf16.mxu0 0
        %1193 = vmatpush1.bf16.msra.mxu0 0
        %1194 = vmatprep.subr.bf16.mxu0 0
        %1195 = vmatpush1.bf16.msra.mxu0 0
        %1196 = vmatprep.subr.bf16.mxu0 0
        %1197 = vmatpush1.bf16.msra.mxu0 0
        %1198 = vmatprep.subr.bf16.mxu0 0
        %1199 = vmatpush1.bf16.msra.mxu0 0
        %1200 = vmatprep.mubr.bf16.mxu0 0
        %1201 = vmatmul.mubr.bf16.gmra.mrb[0].mxu0 %v1166
        %v1202 = vpop.f32.mrb[0].mxu0
        %v1203 = vadd.f32 %v1151, %v1202
        %v1204 = vpop.f32.mrb[0].mxu0
        %v1205 = vpop.f32.mrb[0].mxu0
        %v1206 = vadd.f32 %v1151, %v1205
        %v1207 = vpop.f32.mrb[0].mxu0
        %1208 = vdwg.mxu0
        %v1209 = vmul.f32 %v1203, 0.5
        %v1210 = vmul.f32 %v1206, 0.5
        %v1211 = vmul.f32 %v1203, 0.70710677
        %v1212 = vmul.f32 %v1206, 0.70710677
        %v1213 = verf.f32.pop %v1211
        %v1214 = verf.f32.pop %v1212
        %v1215 = vadd.f32 %v1213, 1.0
        %v1216 = vadd.f32 %v1214, 1.0
        %v1217 = vmul.f32 %v1209, %v1215
        %v1218 = vmul.f32 %v1210, %v1216
        %v1219 = vpack.c.bf16 %v1218, %v1217
        %v1220 = vld [vmem:[%s399] sm:$0xf]
        %v1221 = vld [vmem:[%s399 + $0x4] sm:$0xf]
        %v1222 = vld [vmem:[%s399 + $0x8] sm:$0xf]
        %v1223 = vld [vmem:[%s399 + $0xc] sm:$0xf]
        %v1224 = vld [vmem:[%s399 + $0x10] sm:$0xf]
        %v1225 = vld [vmem:[%s399 + $0x14] sm:$0xf]
        %v1226 = vld [vmem:[%s399 + $0x18] sm:$0xf]
        %v1227 = vld [vmem:[%s399 + $0x1c] sm:$0xf]
        %v1228 = vld [vmem:[%s399 + $0x20] sm:$0xf]
        %v1229 = vld [vmem:[%s399 + $0x24] sm:$0xf]
        %v1230 = vld [vmem:[%s399 + $0x28] sm:$0xf]
        %v1231 = vld [vmem:[%s399 + $0x2c] sm:$0xf]
        %v1232 = vld [vmem:[%s399 + $0x30] sm:$0xf]
        %v1233 = vld [vmem:[%s399 + $0x34] sm:$0xf]
        %v1234 = vld [vmem:[%s399 + $0x38] sm:$0xf]
        %v1235 = vld [vmem:[%s399 + $0x3c] sm:$0xf]
        %v1236 = vlaneseq
        %v1237 = vshrl.u32 %v1236, 7
        %v1238 = vsub.s32 0, %v1237
        %v1239 = vrot.slane %v417, %v1238
        %v1256 = vunpack.c.l.b16 %v1220
        %v1257 = vunpack.c.l.b16 %v1221
        %v1258 = vunpack.c.l.b16 %v1222
        %v1259 = vunpack.c.l.b16 %v1223
        %v1260 = vunpack.c.l.b16 %v1224
        %v1261 = vunpack.c.l.b16 %v1225
        %v1262 = vunpack.c.l.b16 %v1226
        %v1263 = vunpack.c.l.b16 %v1227
        %v1264 = vunpack.c.l.b16 %v1228
        %v1265 = vunpack.c.l.b16 %v1229
        %v1266 = vunpack.c.l.b16 %v1230
        %v1267 = vunpack.c.l.b16 %v1231
        %v1268 = vunpack.c.l.b16 %v1232
        %v1269 = vunpack.c.l.b16 %v1233
        %v1270 = vunpack.c.l.b16 %v1234
        %v1271 = vunpack.c.l.b16 %v1235
        %v1272 = vpack.c.b16 %v1257, %v1256
        %v1273 = vpack.c.b16 %v1259, %v1258
        %v1274 = vpack.c.b16 %v1261, %v1260
        %v1275 = vpack.c.b16 %v1263, %v1262
        %v1276 = vpack.c.b16 %v1265, %v1264
        %v1277 = vpack.c.b16 %v1267, %v1266
        %v1278 = vpack.c.b16 %v1269, %v1268
        %v1279 = vpack.c.b16 %v1271, %v1270
        %1288 = vmatprep.subr.bf16.mxu0 0
        %1289 = vmatpush1.bf16.msra.mxu0 %v1272
        %1290 = vmatprep.subr.bf16.mxu0 0
        %1291 = vmatpush1.bf16.msra.mxu0 %v1273
        %1292 = vmatprep.subr.bf16.mxu0 0
        %1293 = vmatpush1.bf16.msra.mxu0 %v1274
        %1294 = vmatprep.subr.bf16.mxu0 0
        %1295 = vmatpush1.bf16.msra.mxu0 %v1275
        %1296 = vmatprep.subr.bf16.mxu0 0
        %1297 = vmatpush1.bf16.msra.mxu0 %v1276
        %1298 = vmatprep.subr.bf16.mxu0 0
        %1299 = vmatpush1.bf16.msra.mxu0 %v1277
        %1300 = vmatprep.subr.bf16.mxu0 0
        %1301 = vmatpush1.bf16.msra.mxu0 %v1278
        %1302 = vmatprep.subr.bf16.mxu0 0
        %1303 = vmatpush1.bf16.msra.mxu0 %v1279
        %1304 = vmatprep.subr.bf16.mxu0 0
        %1305 = vmatpush1.bf16.msra.mxu0 0
        %1306 = vmatprep.subr.bf16.mxu0 0
        %1307 = vmatpush1.bf16.msra.mxu0 0
        %1308 = vmatprep.subr.bf16.mxu0 0
        %1309 = vmatpush1.bf16.msra.mxu0 0
        %1310 = vmatprep.subr.bf16.mxu0 0
        %1311 = vmatpush1.bf16.msra.mxu0 0
        %1312 = vmatprep.subr.bf16.mxu0 0
        %1313 = vmatpush1.bf16.msra.mxu0 0
        %1314 = vmatprep.subr.bf16.mxu0 0
        %1315 = vmatpush1.bf16.msra.mxu0 0
        %1316 = vmatprep.subr.bf16.mxu0 0
        %1317 = vmatpush1.bf16.msra.mxu0 0
        %1318 = vmatprep.subr.bf16.mxu0 0
        %1319 = vmatpush1.bf16.msra.mxu0 0
        %1320 = vmatprep.mubr.bf16.mxu0 0
        %1321 = vmatmul.mubr.bf16.gmra.mrb[0].mxu0 %v1219
        %v1322 = vpop.f32.mrb[0].mxu0
        %v1323 = vadd.f32 %v1239, %v1322
        %v1324 = vpop.f32.mrb[0].mxu0
        %v1325 = vpop.f32.mrb[0].mxu0
        %v1326 = vadd.f32 %v1239, %v1325
        %v1327 = vpop.f32.mrb[0].mxu0
        %1328 = vdwg.mxu0
        %v1329 = vadd.f32 %v1102, %v1323
        %v1330 = vadd.f32 %v1103, %v1326
        %1331 = vst.msk [vmem:[%s367] sm:$0xff] %vm419, %v1329
        %1332 = vst.msk [vmem:[%s367 + $0x8] sm:$0xff] %vm419, %v1330
        %s1333 = sand.u32 %s223, 1
        %s1334 = scalar_lea.sflag [#allocation3], %s1333
        %s1335 = sand.u32 %s223, 1
        %s1336 = smul.addr %s1335, 16
        %s1337 = scalar_lea.vmem [#allocation2], %s1336
        // Predicated region
        $region53: #{tpu_custom_call.1} parent=47 // pred_check
          %p1338 = pneg %p233
        $region54: #{tpu_custom_call.1} parent=47 // pred_check_branch
          %1340 = sbr.rel (%p1338) target = $region56
        $region55: #{tpu_custom_call.1} parent=47 // pred_region
          %s1342 = ssub.s32 256, 256
          %1343 = vsyncadd %s1334, %s1342
          %s1344 = smul.addr %s25, 2
          %s1345 = smul.addr %s1344, 128
          %s1346 = scalar_lea.hbm %s7, %s1345
          %s1347 = sshll.u32 %s1337, 4
          %s1348 = int_to_ptr.vmem [resolvable:$true] %s1347
          %1353 = dma.vmem_to_hbm [thread:$0]  %s1348, 256, %s1346, %s1334, 128, 128, 8
        $region56: #{tpu_custom_call.1} parent=47 // pred_fallthru
          _
      $region48: #{tpu_custom_call.1} parent=5 // pred_fallthru
        _
      %p1354 = scmp.le.s32.totalorder 2, %s16
      // Predicated region
      $region57: #{tpu_custom_call.1} parent=5 // pred_check
        %p1355 = pneg %p1354
      $region58: #{tpu_custom_call.1} parent=5 // pred_check_branch
        %1357 = sbr.rel (%p1355) target = $region60
      $region59: #{tpu_custom_call.1} parent=5 // pred_region
        %s1358 = ssub.s32 %s16, 2
        // Predicated region
        $region61: #{tpu_custom_call.1} parent=59 // pred_check
          %p1359 = pneg %p239
        $region62: #{tpu_custom_call.1} parent=59 // pred_check_branch
          %1361 = sbr.rel (%p1359) target = $region64
        $region63: #{tpu_custom_call.1} parent=59 // pred_region
          %s1362 = sand.u32 %s224, 1
          %s1363 = scalar_lea.sflag [#allocation3], %s1362
          %s1364 = sand.u32 %s224, 1
          %s1365 = smul.addr %s1364, 16
          %s1366 = scalar_lea.vmem [#allocation2], %s1365
          %1367 = dma.done %s1363, 256
        $region64: #{tpu_custom_call.1} parent=59 // pred_fallthru
          _
      $region60: #{tpu_custom_call.1} parent=5 // pred_fallthru
        _
    $region6: #{tpu_custom_call.1} parent=1 // loop_footer
      %s20 = sadd.s32 1, %s16
    $region7: #{tpu_custom_call.1} parent=1 // loop_footer_branch
      %15 = sbr.rel target = $region3
    $region8: #{tpu_custom_call.1} parent=1 // loop_exit
      _
    %1368 = vsyncpa [#allocation3], 1
    %s1369 = scalar_lea.sflag [#allocation3], 1
    %1370 = vsyncpa %s1369, 1

</llo_original>
